<compile_context>
chip_gen: v6e
topology: v6e:2x2x1
jax: 0.10.0
libtpu: 0.0.40
codegen_flags: <defaults>
</compile_context>

<pallas_src>
import jax
import jax.numpy as jnp
from jax.experimental import pallas as pl
from jax.experimental.pallas import tpu as pltpu


_VMEM_LIMIT_BYTES = 32 * 1024 * 1024  # safe on v5e/v6e/v7x (scoped default ceilings)


# ---------------------------------------------------------------------------
# Conv2d(3x3, stride 2, pad 1) + folded BatchNorm + ReLU  (one layer, one call)
# ---------------------------------------------------------------------------

def _conv_gemm_relu_kernel(w_ref, x_ref, b_ref, o_ref):
    # w_ref: [C_out, C_in*9]   x_ref: [C_in*9, tile_R]   b_ref: [C_out, 1]
    y = jnp.dot(w_ref[...], x_ref[...], preferred_element_type=jnp.float32)
    o_ref[...] = jnp.maximum(y + b_ref[...], 0.0).astype(o_ref.dtype)


def _im2col_s2_k3_p1_cm(x_cm):
    """x_cm: [C, N, H, W] (channel-major) -> ([C*9, N*Ho*Wo], Ho, Wo)."""
    # TODO(synk): the 3x3/stride-2 patch gather still runs as XLA strided
    # slices feeding the kernel; moving it in-kernel needs lane-strided VMEM
    # loads, so only the GEMM/bias/ReLU FLOPs run inside Pallas.
    c, n, h, w = x_cm.shape
    ho = (h - 1) // 2 + 1
    wo = (w - 1) // 2 + 1
    xp = jnp.pad(x_cm, ((0, 0), (0, 0), (1, 1), (1, 1)))
    taps = []
    for kh in range(3):
        for kw in range(3):
            taps.append(
                jax.lax.slice(
                    xp,
                    (0, 0, kh, kw),
                    (c, n, kh + 2 * (ho - 1) + 1, kw + 2 * (wo - 1) + 1),
                    (1, 1, 2, 2)))
    # Row order (ci, kh, kw) matches w.reshape(C_out, C_in*9); no transpose
    # is needed because the activations are already channel-major.
    patches = jnp.stack(taps, axis=1).reshape(c * 9, n * ho * wo)
    return patches, ho, wo


def _pick_tile_r(r_pad):
    for t in (1024, 512, 256, 128):
        if r_pad % t == 0:
            return t
    return r_pad


def _conv_bn_relu(x_cm, w, b, gamma, beta, mean, var, eps=1e-5):
    """x_cm: [C_in, N, H, W] channel-major; w: [C_out, C_in, 3, 3] (OIHW).

    Conv2DNorm = Conv2d + BatchNorm2d (eval mode) + ReLU; the BatchNorm running
    stats are folded into the conv weights/bias exactly.
    Returns [C_out, N, Ho, Wo] channel-major."""
    c_in, n, _, _ = x_cm.shape
    c_out = w.shape[0]
    scale = gamma / jnp.sqrt(var + eps)                              # [C_out]
    w_rows = (w * scale[:, None, None, None]).reshape(c_out, c_in * 9)
    b_eff = ((b - mean) * scale + beta).reshape(c_out, 1)

    patches, ho, wo = _im2col_s2_k3_p1_cm(x_cm)                      # [C_in*9, R]
    k, r = patches.shape

    # Lane-dense tiling over R (multiple of 128), pipelined & core-parallel.
    r_pad = ((r + 127) // 128) * 128
    tile_r = _pick_tile_r(r_pad)
    patches_p = jnp.pad(patches, ((0, 0), (0, r_pad - r)))

    out = pl.pallas_call(
        _conv_gemm_relu_kernel,
        out_shape=jax.ShapeDtypeStruct((c_out, r_pad), jnp.float32),
        grid=(r_pad // tile_r,),
        in_specs=[
            pl.BlockSpec((c_out, k), lambda i: (0, 0)),
            pl.BlockSpec((k, tile_r), lambda i: (0, i)),
            pl.BlockSpec((c_out, 1), lambda i: (0, 0)),
        ],
        out_specs=pl.BlockSpec((c_out, tile_r), lambda i: (0, i)),
        compiler_params=pltpu.CompilerParams(
            dimension_semantics=("parallel",),
            vmem_limit_bytes=_VMEM_LIMIT_BYTES),
    )(w_rows, patches_p, b_eff)

    # Stay channel-major: [C_out, N*Ho*Wo] -> [C_out, N, Ho, Wo] (pure reshape).
    return out[:, :r].reshape(c_out, n, ho, wo)


# ---------------------------------------------------------------------------
# GRU (batch_first), returning the final hidden state — single Pallas kernel
# ---------------------------------------------------------------------------

def _gru_kernel_factory(n_pad, hidden, n_steps):
    def gru_kernel(x_ref, wih_ref, whh_ref, bih_ref, bhh_ref, o_ref, gi_ref):
        # Hoisted input projection: all timesteps at once, one wide matmul per
        # gate (gates on the leading axis of gi_ref -> no lane slicing later).
        # TODO(synk): for production-size T stream this projection in T-chunks
        # (pltpu.emit_pipeline) to bound VMEM; at these sizes it is resident.
        x = x_ref[...]                                    # [T*Np, D]
        for g in range(3):
            gi_ref[g] = (jnp.dot(x, wih_ref[g],
                                 preferred_element_type=jnp.float32)
                         + bih_ref[g])                    # [T*Np, H]

        # Hoist recurrent weights / biases into vregs once (off the serial path).
        w_r, w_z, w_n = whh_ref[0], whh_ref[1], whh_ref[2]
        b_r, b_z, b_n = bhh_ref[0], bhh_ref[1], bhh_ref[2]

        def step(t, h):
            base = pl.multiple_of(t * n_pad, 8)           # sublane-aligned slice
            gi_r = gi_ref[0, pl.ds(base, n_pad), :]
            gi_z = gi_ref[1, pl.ds(base, n_pad), :]
            gi_n = gi_ref[2, pl.ds(base, n_pad), :]
            gh_r = jnp.dot(h, w_r, preferred_element_type=jnp.float32) + b_r
            gh_z = jnp.dot(h, w_z, preferred_element_type=jnp.float32) + b_z
            gh_n = jnp.dot(h, w_n, preferred_element_type=jnp.float32) + b_n
            r = jax.nn.sigmoid(gi_r + gh_r)
            z = jax.nn.sigmoid(gi_z + gh_z)
            ng = jnp.tanh(gi_n + r * gh_n)
            return (1.0 - z) * ng + z * h                 # h stays in vregs

        h0 = jnp.zeros((n_pad, hidden), jnp.float32)
        h_last = jax.lax.fori_loop(0, n_steps, step, h0, unroll=2)
        o_ref[...] = h_last.astype(o_ref.dtype)

    return gru_kernel


def _gru_last_hidden(seq_tnd, w_ih, w_hh, b_ih, b_hh):
    """seq_tnd: [T, N, D]; PyTorch GRU weight layout (gate order r, z, n).
    Returns the final hidden state h_T of shape [N, H]."""
    t, n, d = seq_tnd.shape
    hidden = w_hh.shape[1]
    n_pad = max(8, ((n + 7) // 8) * 8)                    # sublane-aligned batch

    # Rows ordered (t, n); padded batch rows are zeros and are sliced off below.
    x2d = jnp.pad(seq_tnd, ((0, 0), (0, n_pad - n), (0, 0))).reshape(t * n_pad, d)

    # Gate-major parameter layout: [3, D, H], [3, H, H], [3, 1, H].
    wih_g = jnp.transpose(w_ih.reshape(3, hidden, d), (0, 2, 1))
    whh_g = jnp.transpose(w_hh.reshape(3, hidden, hidden), (0, 2, 1))
    bih_g = b_ih.reshape(3, 1, hidden)
    bhh_g = b_hh.reshape(3, 1, hidden)

    out = pl.pallas_call(
        _gru_kernel_factory(n_pad, hidden, t),
        out_shape=jax.ShapeDtypeStruct((n_pad, hidden), jnp.float32),
        grid=(1,),
        in_specs=[
            pl.BlockSpec((t * n_pad, d), lambda i: (0, 0)),
            pl.BlockSpec((3, d, hidden), lambda i: (0, 0, 0)),
            pl.BlockSpec((3, hidden, hidden), lambda i: (0, 0, 0)),
            pl.BlockSpec((3, 1, hidden), lambda i: (0, 0, 0)),
            pl.BlockSpec((3, 1, hidden), lambda i: (0, 0, 0)),
        ],
        out_specs=pl.BlockSpec((n_pad, hidden), lambda i: (0, 0)),
        scratch_shapes=[
            pltpu.VMEM((3, t * n_pad, hidden), jnp.float32),  # hoisted gate pre-acts
        ],
        compiler_params=pltpu.CompilerParams(
            dimension_semantics=("arbitrary",),
            vmem_limit_bytes=_VMEM_LIMIT_BYTES),
    )(x2d, wih_g, whh_g, bih_g, bhh_g)

    return out[:n]


# ---------------------------------------------------------------------------
# Full ReferenceEncoder forward
# ---------------------------------------------------------------------------

def reference_encoder_forward(mel, conv_params, gru_params):
    """mel: [N, T, n_mels] float32. Returns [N, emb_dim // 2] (final GRU hidden)."""
    x = mel[None, :, :, :]                                   # channel-major [1, N, T, M]
    for (w, b, gamma, beta, mean, var) in conv_params:
        x = _conv_bn_relu(x, w, b, gamma, beta, mean, var)   # stays [C, N, H, W]
    c, n, tp, mp = x.shape
    # permute(0,2,1,3).reshape(N, T', C*M') in (t, n)-row order for the GRU:
    seq_tnd = jnp.transpose(x, (2, 1, 0, 3)).reshape(tp, n, c * mp)
    return _gru_last_hidden(seq_tnd, *gru_params)


# ---------------------------------------------------------------------------
# Pure-JAX reference (matches the PyTorch forward; eval-mode BatchNorm)
# ---------------------------------------------------------------------------

def _reference(mel, conv_params, gru_params, eps=1e-5):
    x = mel[:, None, :, :]
    for (w, b, gamma, beta, mean, var) in conv_params:
        x = jax.lax.conv_general_dilated(
            x, w, window_strides=(2, 2), padding=((1, 1), (1, 1)),
            dimension_numbers=("NCHW", "OIHW", "NCHW"),
            precision=jax.lax.Precision.HIGHEST)
        x = x + b[None, :, None, None]
        x = ((x - mean[None, :, None, None])
             * (gamma[None, :, None, None] / jnp.sqrt(var[None, :, None, None] + eps))
             + beta[None, :, None, None])
        x = jnp.maximum(x, 0.0)
    n, c, tp, mp = x.shape
    seq = jnp.transpose(x, (0, 2, 1, 3)).reshape(n, tp, c * mp)

    w_ih, w_hh, b_ih, b_hh = gru_params
    hidden = w_hh.shape[1]
    h = jnp.zeros((n, hidden), jnp.float32)
    for t in range(tp):
        xt = seq[:, t, :]
        gi = xt @ w_ih.T + b_ih
        gh = h @ w_hh.T + b_hh
        r = jax.nn.sigmoid(gi[:, :hidden] + gh[:, :hidden])
        z = jax.nn.sigmoid(gi[:, hidden:2 * hidden] + gh[:, hidden:2 * hidden])
        ng = jnp.tanh(gi[:, 2 * hidden:] + r * gh[:, 2 * hidden:])
        h = (1.0 - z) * ng + z * h
    return h


if __name__ == "__main__":
    # Small shapes consistent with the module.
    N, T, n_mels = 2, 16, 16
    ref_enc_filters = [4, 8, 16]            # toy-sized GSTParams.ref_enc_filters
    emb_dim = 32
    hidden = emb_dim // 2                   # GRU hidden size = 16

    key = jax.random.PRNGKey(0)

    def uniform(k, shape, bound):
        return jax.random.uniform(k, shape, jnp.float32, -bound, bound)

    filters = [1] + ref_enc_filters
    conv_params = []
    for i in range(len(ref_enc_filters)):
        c_in, c_out = filters[i], filters[i + 1]
        key, kw_, kb_, kg_, kbe_, km_, kv_ = jax.random.split(key, 7)
        bound = 1.0 / (c_in * 9) ** 0.5
        w = uniform(kw_, (c_out, c_in, 3, 3), bound)
        b = uniform(kb_, (c_out,), bound)
        gamma = jax.random.uniform(kg_, (c_out,), jnp.float32, 0.5, 1.5)
        beta = uniform(kbe_, (c_out,), 0.1)
        mean = uniform(km_, (c_out,), 0.1)
        var = jax.random.uniform(kv_, (c_out,), jnp.float32, 0.5, 1.5)
        conv_params.append((w, b, gamma, beta, mean, var))
    conv_params = tuple(conv_params)

    # GRU input size = ref_enc_filters[-1] * calculate_channels(n_mels, 3, 2, 1, K)
    m_out = n_mels
    for _ in ref_enc_filters:
        m_out = (m_out - 3 + 2) // 2 + 1
    d_in = ref_enc_filters[-1] * m_out      # 16 * 2 = 32

    key, kih, khh, kbi, kbh, kmel = jax.random.split(key, 6)
    gbound = 1.0 / hidden ** 0.5
    gru_params = (
        uniform(kih, (3 * hidden, d_in), gbound),     # weight_ih_l0
        uniform(khh, (3 * hidden, hidden), gbound),   # weight_hh_l0
        uniform(kbi, (3 * hidden,), gbound),          # bias_ih_l0
        uniform(kbh, (3 * hidden,), gbound),          # bias_hh_l0
    )

    mel = jax.random.normal(kmel, (N, T, n_mels), jnp.float32)

    fwd = jax.jit(reference_encoder_forward)
    out = jax.block_until_ready(fwd(mel, conv_params, gru_params))

    ref = _reference(mel, conv_params, gru_params)
    assert out.shape == (N, hidden), out.shape
    assert jnp.allclose(out, ref, atol=2e-3, rtol=2e-3), (
        "Pallas ReferenceEncoder mismatch vs reference; max abs err = "
        f"{jnp.max(jnp.abs(out - ref))}")
    print("KERNEL_OK")
</pallas_src>

<mosaic_0001>
module attributes {stable_mosaic.version = 11 : i64} {
  func.func @_conv_gemm_relu_kernel(%arg0: i32, %arg1: memref<4x9xf32, #tpu.memory_space<vmem>>, %arg2: memref<9x128xf32, #tpu.memory_space<vmem>>, %arg3: memref<4x1xf32, #tpu.memory_space<vmem>>, %arg4: memref<4x128xf32, #tpu.memory_space<vmem>>) attributes {dimension_semantics = [#tpu.dimension_semantics<parallel>], iteration_bounds = array<i64: 1>, scalar_prefetch = 0 : i64, scratch_operands = 0 : i64, tpu.core_type = #tpu.core_type<tc>, window_params = [{pipeline_mode = #tpu.pipeline_mode<synchronous>, transform_indices = @transform_0, window_bounds = array<i64: 4, 9>}, {transform_indices = @transform_1, window_bounds = array<i64: 9, 128>}, {pipeline_mode = #tpu.pipeline_mode<synchronous>, transform_indices = @transform_2, window_bounds = array<i64: 4, 1>}, {transform_indices = @transform_3, window_bounds = array<i64: 4, 128>}]} {
    %c0 = arith.constant 0 : index
    %c0_0 = arith.constant 0 : index
    %0 = vector.load %arg1[%c0, %c0_0] : memref<4x9xf32, #tpu.memory_space<vmem>>, vector<4x9xf32>
    %c0_1 = arith.constant 0 : index
    %c0_2 = arith.constant 0 : index
    %1 = vector.load %arg2[%c0_1, %c0_2] : memref<9x128xf32, #tpu.memory_space<vmem>>, vector<9x128xf32>
    %cst = arith.constant dense<0.000000e+00> : vector<4x128xf32>
    %2 = tpu.matmul %0, %1, %cst {dimension_numbers = #tpu.dot_dimension_numbers<[1], [0], [0], [1], [0, 0, 1, 1], [], []>} : vector<4x9xf32>, vector<9x128xf32>, vector<4x128xf32> -> vector<4x128xf32>
    %c0_3 = arith.constant 0 : index
    %c0_4 = arith.constant 0 : index
    %3 = vector.load %arg3[%c0_3, %c0_4] : memref<4x1xf32, #tpu.memory_space<vmem>>, vector<4x1xf32>
    %4 = vector.broadcast %3 : vector<4x1xf32> to vector<4x128xf32>
    %5 = arith.addf %2, %4 : vector<4x128xf32>
    %cst_5 = arith.constant 0.000000e+00 : f32
    %6 = vector.broadcast %cst_5 : f32 to vector<4x128xf32>
    %7 = arith.maximumf %5, %6 : vector<4x128xf32>
    %c0_6 = arith.constant 0 : index
    %c0_7 = arith.constant 0 : index
    %8 = vector.load %arg4[%c0_6, %c0_7] : memref<4x128xf32, #tpu.memory_space<vmem>>, vector<4x128xf32>
    tpu.vector_store %arg4[%c0_6, %c0_7], %7 {strides = array<i32>} : memref<4x128xf32, #tpu.memory_space<vmem>>, vector<4x128xf32>,
    return
  }
  func.func @transform_0(%arg0: i32) -> (i32, i32) {
    %c0_i32 = arith.constant 0 : i32
    %c0_i32_0 = arith.constant 0 : i32
    %c0_i32_1 = arith.constant 0 : i32
    return %c0_i32, %c0_i32_0 : i32, i32
  }
  func.func @transform_1(%arg0: i32) -> (i32, i32) {
    %c0_i32 = arith.constant 0 : i32
    %c0_i32_0 = arith.constant 0 : i32
    return %c0_i32, %arg0 : i32, i32
  }
  func.func @transform_2(%arg0: i32) -> (i32, i32) {
    %c0_i32 = arith.constant 0 : i32
    %c0_i32_0 = arith.constant 0 : i32
    %c0_i32_1 = arith.constant 0 : i32
    return %c0_i32, %c0_i32_0 : i32, i32
  }
  func.func @transform_3(%arg0: i32) -> (i32, i32) {
    %c0_i32 = arith.constant 0 : i32
    %c0_i32_0 = arith.constant 0 : i32
    return %c0_i32, %arg0 : i32, i32
  }
}

module attributes {stable_mosaic.version = 11 : i64} {
  func.func @_conv_gemm_relu_kernel(%arg0: i32, %arg1: memref<8x36xf32, #tpu.memory_space<vmem>>, %arg2: memref<36x128xf32, #tpu.memory_space<vmem>>, %arg3: memref<8x1xf32, #tpu.memory_space<vmem>>, %arg4: memref<8x128xf32, #tpu.memory_space<vmem>>) attributes {dimension_semantics = [#tpu.dimension_semantics<parallel>], iteration_bounds = array<i64: 1>, scalar_prefetch = 0 : i64, scratch_operands = 0 : i64, tpu.core_type = #tpu.core_type<tc>, window_params = [{pipeline_mode = #tpu.pipeline_mode<synchronous>, transform_indices = @transform_0, window_bounds = array<i64: 8, 36>}, {transform_indices = @transform_1, window_bounds = array<i64: 36, 128>}, {pipeline_mode = #tpu.pipeline_mode<synchronous>, transform_indices = @transform_2, window_bounds = array<i64: 8, 1>}, {transform_indices = @transform_3, window_bounds = array<i64: 8, 128>}]} {
    %c0 = arith.constant 0 : index
    %c0_0 = arith.constant 0 : index
    %0 = vector.load %arg1[%c0, %c0_0] : memref<8x36xf32, #tpu.memory_space<vmem>>, vector<8x36xf32>
    %c0_1 = arith.constant 0 : index
    %c0_2 = arith.constant 0 : index
    %1 = vector.load %arg2[%c0_1, %c0_2] : memref<36x128xf32, #tpu.memory_space<vmem>>, vector<36x128xf32>
    %cst = arith.constant dense<0.000000e+00> : vector<8x128xf32>
    %2 = tpu.matmul %0, %1, %cst {dimension_numbers = #tpu.dot_dimension_numbers<[1], [0], [0], [1], [0, 0, 1, 1], [], []>} : vector<8x36xf32>, vector<36x128xf32>, vector<8x128xf32> -> vector<8x128xf32>
    %c0_3 = arith.constant 0 : index
    %c0_4 = arith.constant 0 : index
    %3 = vector.load %arg3[%c0_3, %c0_4] : memref<8x1xf32, #tpu.memory_space<vmem>>, vector<8x1xf32>
    %4 = vector.broadcast %3 : vector<8x1xf32> to vector<8x128xf32>
    %5 = arith.addf %2, %4 : vector<8x128xf32>
    %cst_5 = arith.constant 0.000000e+00 : f32
    %6 = vector.broadcast %cst_5 : f32 to vector<8x128xf32>
    %7 = arith.maximumf %5, %6 : vector<8x128xf32>
    %c0_6 = arith.constant 0 : index
    %c0_7 = arith.constant 0 : index
    %8 = vector.load %arg4[%c0_6, %c0_7] : memref<8x128xf32, #tpu.memory_space<vmem>>, vector<8x128xf32>
    tpu.vector_store %arg4[%c0_6, %c0_7], %7 {strides = array<i32>} : memref<8x128xf32, #tpu.memory_space<vmem>>, vector<8x128xf32>,
    return
  }
  func.func @transform_0(%arg0: i32) -> (i32, i32) {
    %c0_i32 = arith.constant 0 : i32
    %c0_i32_0 = arith.constant 0 : i32
    %c0_i32_1 = arith.constant 0 : i32
    return %c0_i32, %c0_i32_0 : i32, i32
  }
  func.func @transform_1(%arg0: i32) -> (i32, i32) {
    %c0_i32 = arith.constant 0 : i32
    %c0_i32_0 = arith.constant 0 : i32
    return %c0_i32, %arg0 : i32, i32
  }
  func.func @transform_2(%arg0: i32) -> (i32, i32) {
    %c0_i32 = arith.constant 0 : i32
    %c0_i32_0 = arith.constant 0 : i32
    %c0_i32_1 = arith.constant 0 : i32
    return %c0_i32, %c0_i32_0 : i32, i32
  }
  func.func @transform_3(%arg0: i32) -> (i32, i32) {
    %c0_i32 = arith.constant 0 : i32
    %c0_i32_0 = arith.constant 0 : i32
    return %c0_i32, %arg0 : i32, i32
  }
}

module attributes {stable_mosaic.version = 11 : i64} {
  func.func @_conv_gemm_relu_kernel(%arg0: i32, %arg1: memref<16x72xf32, #tpu.memory_space<vmem>>, %arg2: memref<72x128xf32, #tpu.memory_space<vmem>>, %arg3: memref<16x1xf32, #tpu.memory_space<vmem>>, %arg4: memref<16x128xf32, #tpu.memory_space<vmem>>) attributes {dimension_semantics = [#tpu.dimension_semantics<parallel>], iteration_bounds = array<i64: 1>, scalar_prefetch = 0 : i64, scratch_operands = 0 : i64, tpu.core_type = #tpu.core_type<tc>, window_params = [{pipeline_mode = #tpu.pipeline_mode<synchronous>, transform_indices = @transform_0, window_bounds = array<i64: 16, 72>}, {transform_indices = @transform_1, window_bounds = array<i64: 72, 128>}, {pipeline_mode = #tpu.pipeline_mode<synchronous>, transform_indices = @transform_2, window_bounds = array<i64: 16, 1>}, {transform_indices = @transform_3, window_bounds = array<i64: 16, 128>}]} {
    %c0 = arith.constant 0 : index
    %c0_0 = arith.constant 0 : index
    %0 = vector.load %arg1[%c0, %c0_0] : memref<16x72xf32, #tpu.memory_space<vmem>>, vector<16x72xf32>
    %c0_1 = arith.constant 0 : index
    %c0_2 = arith.constant 0 : index
    %1 = vector.load %arg2[%c0_1, %c0_2] : memref<72x128xf32, #tpu.memory_space<vmem>>, vector<72x128xf32>
    %cst = arith.constant dense<0.000000e+00> : vector<16x128xf32>
    %2 = tpu.matmul %0, %1, %cst {dimension_numbers = #tpu.dot_dimension_numbers<[1], [0], [0], [1], [0, 0, 1, 1], [], []>} : vector<16x72xf32>, vector<72x128xf32>, vector<16x128xf32> -> vector<16x128xf32>
    %c0_3 = arith.constant 0 : index
    %c0_4 = arith.constant 0 : index
    %3 = vector.load %arg3[%c0_3, %c0_4] : memref<16x1xf32, #tpu.memory_space<vmem>>, vector<16x1xf32>
    %4 = vector.broadcast %3 : vector<16x1xf32> to vector<16x128xf32>
    %5 = arith.addf %2, %4 : vector<16x128xf32>
    %cst_5 = arith.constant 0.000000e+00 : f32
    %6 = vector.broadcast %cst_5 : f32 to vector<16x128xf32>
    %7 = arith.maximumf %5, %6 : vector<16x128xf32>
    %c0_6 = arith.constant 0 : index
    %c0_7 = arith.constant 0 : index
    %8 = vector.load %arg4[%c0_6, %c0_7] : memref<16x128xf32, #tpu.memory_space<vmem>>, vector<16x128xf32>
    tpu.vector_store %arg4[%c0_6, %c0_7], %7 {strides = array<i32>} : memref<16x128xf32, #tpu.memory_space<vmem>>, vector<16x128xf32>,
    return
  }
  func.func @transform_0(%arg0: i32) -> (i32, i32) {
    %c0_i32 = arith.constant 0 : i32
    %c0_i32_0 = arith.constant 0 : i32
    %c0_i32_1 = arith.constant 0 : i32
    return %c0_i32, %c0_i32_0 : i32, i32
  }
  func.func @transform_1(%arg0: i32) -> (i32, i32) {
    %c0_i32 = arith.constant 0 : i32
    %c0_i32_0 = arith.constant 0 : i32
    return %c0_i32, %arg0 : i32, i32
  }
  func.func @transform_2(%arg0: i32) -> (i32, i32) {
    %c0_i32 = arith.constant 0 : i32
    %c0_i32_0 = arith.constant 0 : i32
    %c0_i32_1 = arith.constant 0 : i32
    return %c0_i32, %c0_i32_0 : i32, i32
  }
  func.func @transform_3(%arg0: i32) -> (i32, i32) {
    %c0_i32 = arith.constant 0 : i32
    %c0_i32_0 = arith.constant 0 : i32
    return %c0_i32, %arg0 : i32, i32
  }
}

module attributes {stable_mosaic.version = 11 : i64} {
  func.func @gru_kernel(%arg0: i32, %arg1: memref<16x32xf32, #tpu.memory_space<vmem>>, %arg2: memref<3x32x16xf32, #tpu.memory_space<vmem>>, %arg3: memref<3x16x16xf32, #tpu.memory_space<vmem>>, %arg4: memref<3x1x16xf32, #tpu.memory_space<vmem>>, %arg5: memref<3x1x16xf32, #tpu.memory_space<vmem>>, %arg6: memref<8x16xf32, #tpu.memory_space<vmem>>, %arg7: memref<3x16x16xf32, #tpu.memory_space<vmem>>) attributes {dimension_semantics = [#tpu.dimension_semantics<arbitrary>], iteration_bounds = array<i64: 1>, scalar_prefetch = 0 : i64, scratch_operands = 1 : i64, tpu.core_type = #tpu.core_type<tc>, window_params = [{pipeline_mode = #tpu.pipeline_mode<synchronous>, transform_indices = @transform_0, window_bounds = array<i64: 16, 32>}, {pipeline_mode = #tpu.pipeline_mode<synchronous>, transform_indices = @transform_1, window_bounds = array<i64: 3, 32, 16>}, {pipeline_mode = #tpu.pipeline_mode<synchronous>, transform_indices = @transform_2, window_bounds = array<i64: 3, 16, 16>}, {pipeline_mode = #tpu.pipeline_mode<synchronous>, transform_indices = @transform_3, window_bounds = array<i64: 3, 1, 16>}, {pipeline_mode = #tpu.pipeline_mode<synchronous>, transform_indices = @transform_4, window_bounds = array<i64: 3, 1, 16>}, {pipeline_mode = #tpu.pipeline_mode<synchronous>, transform_indices = @transform_5, window_bounds = array<i64: 8, 16>}]} {
    %c0 = arith.constant 0 : index
    %c0_0 = arith.constant 0 : index
    %0 = vector.load %arg1[%c0, %c0_0] : memref<16x32xf32, #tpu.memory_space<vmem>>, vector<16x32xf32>
    %c0_1 = arith.constant 0 : index
    %c0_2 = arith.constant 0 : index
    %c0_3 = arith.constant 0 : index
    %1 = vector.load %arg2[%c0_1, %c0_2, %c0_3] : memref<3x32x16xf32, #tpu.memory_space<vmem>>, vector<1x32x16xf32>
    %2 = vector.shape_cast %1 : vector<1x32x16xf32> to vector<32x16xf32>
    %cst = arith.constant dense<0.000000e+00> : vector<16x16xf32>
    %3 = tpu.matmul %0, %2, %cst {dimension_numbers = #tpu.dot_dimension_numbers<[1], [0], [0], [1], [0, 0, 1, 1], [], []>} : vector<16x32xf32>, vector<32x16xf32>, vector<16x16xf32> -> vector<16x16xf32>
    %c0_4 = arith.constant 0 : index
    %c0_5 = arith.constant 0 : index
    %c0_6 = arith.constant 0 : index
    %4 = vector.load %arg4[%c0_4, %c0_5, %c0_6] : memref<3x1x16xf32, #tpu.memory_space<vmem>>, vector<1x1x16xf32>
    %5 = vector.shape_cast %4 : vector<1x1x16xf32> to vector<1x16xf32>
    %6 = vector.broadcast %5 : vector<1x16xf32> to vector<16x16xf32>
    %7 = arith.addf %3, %6 : vector<16x16xf32>
    %c0_7 = arith.constant 0 : index
    %c0_8 = arith.constant 0 : index
    %c0_9 = arith.constant 0 : index
    %8 = vector.load %arg7[%c0_7, %c0_8, %c0_9] : memref<3x16x16xf32, #tpu.memory_space<vmem>>, vector<1x16x16xf32>
    %9 = vector.shape_cast %8 : vector<1x16x16xf32> to vector<16x16xf32>
    %10 = vector.shape_cast %7 : vector<16x16xf32> to vector<1x16x16xf32>
    tpu.vector_store %arg7[%c0_7, %c0_8, %c0_9], %10 {strides = array<i32>} : memref<3x16x16xf32, #tpu.memory_space<vmem>>, vector<1x16x16xf32>,
    %c1 = arith.constant 1 : index
    %c0_10 = arith.constant 0 : index
    %c0_11 = arith.constant 0 : index
    %11 = vector.load %arg2[%c1, %c0_10, %c0_11] : memref<3x32x16xf32, #tpu.memory_space<vmem>>, vector<1x32x16xf32>
    %12 = vector.shape_cast %11 : vector<1x32x16xf32> to vector<32x16xf32>
    %cst_12 = arith.constant dense<0.000000e+00> : vector<16x16xf32>
    %13 = tpu.matmul %0, %12, %cst_12 {dimension_numbers = #tpu.dot_dimension_numbers<[1], [0], [0], [1], [0, 0, 1, 1], [], []>} : vector<16x32xf32>, vector<32x16xf32>, vector<16x16xf32> -> vector<16x16xf32>
    %c1_13 = arith.constant 1 : index
    %c0_14 = arith.constant 0 : index
    %c0_15 = arith.constant 0 : index
    %14 = vector.load %arg4[%c1_13, %c0_14, %c0_15] : memref<3x1x16xf32, #tpu.memory_space<vmem>>, vector<1x1x16xf32>
    %15 = vector.shape_cast %14 : vector<1x1x16xf32> to vector<1x16xf32>
    %16 = vector.broadcast %15 : vector<1x16xf32> to vector<16x16xf32>
    %17 = arith.addf %13, %16 : vector<16x16xf32>
    %c1_16 = arith.constant 1 : index
    %c0_17 = arith.constant 0 : index
    %c0_18 = arith.constant 0 : index
    %18 = vector.load %arg7[%c1_16, %c0_17, %c0_18] : memref<3x16x16xf32, #tpu.memory_space<vmem>>, vector<1x16x16xf32>
    %19 = vector.shape_cast %18 : vector<1x16x16xf32> to vector<16x16xf32>
    %20 = vector.shape_cast %17 : vector<16x16xf32> to vector<1x16x16xf32>
    tpu.vector_store %arg7[%c1_16, %c0_17, %c0_18], %20 {strides = array<i32>} : memref<3x16x16xf32, #tpu.memory_space<vmem>>, vector<1x16x16xf32>,
    %c2 = arith.constant 2 : index
    %c0_19 = arith.constant 0 : index
    %c0_20 = arith.constant 0 : index
    %21 = vector.load %arg2[%c2, %c0_19, %c0_20] : memref<3x32x16xf32, #tpu.memory_space<vmem>>, vector<1x32x16xf32>
    %22 = vector.shape_cast %21 : vector<1x32x16xf32> to vector<32x16xf32>
    %cst_21 = arith.constant dense<0.000000e+00> : vector<16x16xf32>
    %23 = tpu.matmul %0, %22, %cst_21 {dimension_numbers = #tpu.dot_dimension_numbers<[1], [0], [0], [1], [0, 0, 1, 1], [], []>} : vector<16x32xf32>, vector<32x16xf32>, vector<16x16xf32> -> vector<16x16xf32>
    %c2_22 = arith.constant 2 : index
    %c0_23 = arith.constant 0 : index
    %c0_24 = arith.constant 0 : index
    %24 = vector.load %arg4[%c2_22, %c0_23, %c0_24] : memref<3x1x16xf32, #tpu.memory_space<vmem>>, vector<1x1x16xf32>
    %25 = vector.shape_cast %24 : vector<1x1x16xf32> to vector<1x16xf32>
    %26 = vector.broadcast %25 : vector<1x16xf32> to vector<16x16xf32>
    %27 = arith.addf %23, %26 : vector<16x16xf32>
    %c2_25 = arith.constant 2 : index
    %c0_26 = arith.constant 0 : index
    %c0_27 = arith.constant 0 : index
    %28 = vector.load %arg7[%c2_25, %c0_26, %c0_27] : memref<3x16x16xf32, #tpu.memory_space<vmem>>, vector<1x16x16xf32>
    %29 = vector.shape_cast %28 : vector<1x16x16xf32> to vector<16x16xf32>
    %30 = vector.shape_cast %27 : vector<16x16xf32> to vector<1x16x16xf32>
    tpu.vector_store %arg7[%c2_25, %c0_26, %c0_27], %30 {strides = array<i32>} : memref<3x16x16xf32, #tpu.memory_space<vmem>>, vector<1x16x16xf32>,
    %c0_28 = arith.constant 0 : index
    %c0_29 = arith.constant 0 : index
    %c0_30 = arith.constant 0 : index
    %31 = vector.load %arg3[%c0_28, %c0_29, %c0_30] : memref<3x16x16xf32, #tpu.memory_space<vmem>>, vector<1x16x16xf32>
    %32 = vector.shape_cast %31 : vector<1x16x16xf32> to vector<16x16xf32>
    %c1_31 = arith.constant 1 : index
    %c0_32 = arith.constant 0 : index
    %c0_33 = arith.constant 0 : index
    %33 = vector.load %arg3[%c1_31, %c0_32, %c0_33] : memref<3x16x16xf32, #tpu.memory_space<vmem>>, vector<1x16x16xf32>
    %34 = vector.shape_cast %33 : vector<1x16x16xf32> to vector<16x16xf32>
    %c2_34 = arith.constant 2 : index
    %c0_35 = arith.constant 0 : index
    %c0_36 = arith.constant 0 : index
    %35 = vector.load %arg3[%c2_34, %c0_35, %c0_36] : memref<3x16x16xf32, #tpu.memory_space<vmem>>, vector<1x16x16xf32>
    %36 = vector.shape_cast %35 : vector<1x16x16xf32> to vector<16x16xf32>
    %c0_37 = arith.constant 0 : index
    %c0_38 = arith.constant 0 : index
    %c0_39 = arith.constant 0 : index
    %37 = vector.load %arg5[%c0_37, %c0_38, %c0_39] : memref<3x1x16xf32, #tpu.memory_space<vmem>>, vector<1x1x16xf32>
    %38 = vector.shape_cast %37 : vector<1x1x16xf32> to vector<1x16xf32>
    %c1_40 = arith.constant 1 : index
    %c0_41 = arith.constant 0 : index
    %c0_42 = arith.constant 0 : index
    %39 = vector.load %arg5[%c1_40, %c0_41, %c0_42] : memref<3x1x16xf32, #tpu.memory_space<vmem>>, vector<1x1x16xf32>
    %40 = vector.shape_cast %39 : vector<1x1x16xf32> to vector<1x16xf32>
    %c2_43 = arith.constant 2 : index
    %c0_44 = arith.constant 0 : index
    %c0_45 = arith.constant 0 : index
    %41 = vector.load %arg5[%c2_43, %c0_44, %c0_45] : memref<3x1x16xf32, #tpu.memory_space<vmem>>, vector<1x1x16xf32>
    %42 = vector.shape_cast %41 : vector<1x1x16xf32> to vector<1x16xf32>
    %cst_46 = arith.constant 0.000000e+00 : f32
    %43 = vector.broadcast %cst_46 : f32 to vector<8x16xf32>
    %c0_i32 = arith.constant 0 : i32
    %c8_i32 = arith.constant 8 : i32
    %44 = arith.muli %c0_i32, %c8_i32 : i32
    %45 = tpu.assume_multiple %44, 8 : i32
    %c0_47 = arith.constant 0 : index
    %46 = arith.index_cast %45 : i32 to index
    %c0_48 = arith.constant 0 : index
    %47 = vector.load %arg7[%c0_47, %46, %c0_48] : memref<3x16x16xf32, #tpu.memory_space<vmem>>, vector<1x8x16xf32>
    %48 = vector.shape_cast %47 : vector<1x8x16xf32> to vector<8x16xf32>
    %c1_49 = arith.constant 1 : index
    %49 = arith.index_cast %45 : i32 to index
    %c0_50 = arith.constant 0 : index
    %50 = vector.load %arg7[%c1_49, %49, %c0_50] : memref<3x16x16xf32, #tpu.memory_space<vmem>>, vector<1x8x16xf32>
    %51 = vector.shape_cast %50 : vector<1x8x16xf32> to vector<8x16xf32>
    %c2_51 = arith.constant 2 : index
    %52 = arith.index_cast %45 : i32 to index
    %c0_52 = arith.constant 0 : index
    %53 = vector.load %arg7[%c2_51, %52, %c0_52] : memref<3x16x16xf32, #tpu.memory_space<vmem>>, vector<1x8x16xf32>
    %54 = vector.shape_cast %53 : vector<1x8x16xf32> to vector<8x16xf32>
    %cst_53 = arith.constant dense<0.000000e+00> : vector<8x16xf32>
    %55 = tpu.matmul %43, %32, %cst_53 {dimension_numbers = #tpu.dot_dimension_numbers<[1], [0], [0], [1], [0, 0, 1, 1], [], []>} : vector<8x16xf32>, vector<16x16xf32>, vector<8x16xf32> -> vector<8x16xf32>
    %56 = vector.broadcast %38 : vector<1x16xf32> to vector<8x16xf32>
    %57 = arith.addf %55, %56 : vector<8x16xf32>
    %cst_54 = arith.constant dense<0.000000e+00> : vector<8x16xf32>
    %58 = tpu.matmul %43, %34, %cst_54 {dimension_numbers = #tpu.dot_dimension_numbers<[1], [0], [0], [1], [0, 0, 1, 1], [], []>} : vector<8x16xf32>, vector<16x16xf32>, vector<8x16xf32> -> vector<8x16xf32>
    %59 = vector.broadcast %40 : vector<1x16xf32> to vector<8x16xf32>
    %60 = arith.addf %58, %59 : vector<8x16xf32>
    %cst_55 = arith.constant dense<0.000000e+00> : vector<8x16xf32>
    %61 = tpu.matmul %43, %36, %cst_55 {dimension_numbers = #tpu.dot_dimension_numbers<[1], [0], [0], [1], [0, 0, 1, 1], [], []>} : vector<8x16xf32>, vector<16x16xf32>, vector<8x16xf32> -> vector<8x16xf32>
    %62 = vector.broadcast %42 : vector<1x16xf32> to vector<8x16xf32>
    %63 = arith.addf %61, %62 : vector<8x16xf32>
    %64 = arith.addf %48, %57 : vector<8x16xf32>
    %65 = arith.negf %64 : vector<8x16xf32>
    %66 = math.exp %65 : vector<8x16xf32>
    %cst_56 = arith.constant 1.000000e+00 : f32
    %67 = vector.broadcast %cst_56 : f32 to vector<8x16xf32>
    %68 = arith.addf %67, %66 : vector<8x16xf32>
    %69 = arith.divf %67, %68 : vector<8x16xf32>
    %70 = arith.addf %51, %60 : vector<8x16xf32>
    %71 = arith.negf %70 : vector<8x16xf32>
    %72 = math.exp %71 : vector<8x16xf32>
    %cst_57 = arith.constant 1.000000e+00 : f32
    %73 = vector.broadcast %cst_57 : f32 to vector<8x16xf32>
    %74 = arith.addf %73, %72 : vector<8x16xf32>
    %75 = arith.divf %73, %74 : vector<8x16xf32>
    %76 = arith.mulf %69, %63 : vector<8x16xf32>
    %77 = arith.addf %54, %76 : vector<8x16xf32>
    %78 = math.tanh %77 : vector<8x16xf32>
    %cst_58 = arith.constant 1.000000e+00 : f32
    %79 = vector.broadcast %cst_58 : f32 to vector<8x16xf32>
    %80 = arith.subf %79, %75 : vector<8x16xf32>
    %81 = arith.mulf %80, %78 : vector<8x16xf32>
    %82 = arith.mulf %75, %43 : vector<8x16xf32>
    %83 = arith.addf %81, %82 : vector<8x16xf32>
    %c1_i32 = arith.constant 1 : i32
    %c8_i32_59 = arith.constant 8 : i32
    %84 = arith.muli %c1_i32, %c8_i32_59 : i32
    %85 = tpu.assume_multiple %84, 8 : i32
    %c0_60 = arith.constant 0 : index
    %86 = arith.index_cast %85 : i32 to index
    %c0_61 = arith.constant 0 : index
    %87 = vector.load %arg7[%c0_60, %86, %c0_61] : memref<3x16x16xf32, #tpu.memory_space<vmem>>, vector<1x8x16xf32>
    %88 = vector.shape_cast %87 : vector<1x8x16xf32> to vector<8x16xf32>
    %c1_62 = arith.constant 1 : index
    %89 = arith.index_cast %85 : i32 to index
    %c0_63 = arith.constant 0 : index
    %90 = vector.load %arg7[%c1_62, %89, %c0_63] : memref<3x16x16xf32, #tpu.memory_space<vmem>>, vector<1x8x16xf32>
    %91 = vector.shape_cast %90 : vector<1x8x16xf32> to vector<8x16xf32>
    %c2_64 = arith.constant 2 : index
    %92 = arith.index_cast %85 : i32 to index
    %c0_65 = arith.constant 0 : index
    %93 = vector.load %arg7[%c2_64, %92, %c0_65] : memref<3x16x16xf32, #tpu.memory_space<vmem>>, vector<1x8x16xf32>
    %94 = vector.shape_cast %93 : vector<1x8x16xf32> to vector<8x16xf32>
    %cst_66 = arith.constant dense<0.000000e+00> : vector<8x16xf32>
    %95 = tpu.matmul %83, %32, %cst_66 {dimension_numbers = #tpu.dot_dimension_numbers<[1], [0], [0], [1], [0, 0, 1, 1], [], []>} : vector<8x16xf32>, vector<16x16xf32>, vector<8x16xf32> -> vector<8x16xf32>
    %96 = vector.broadcast %38 : vector<1x16xf32> to vector<8x16xf32>
    %97 = arith.addf %95, %96 : vector<8x16xf32>
    %cst_67 = arith.constant dense<0.000000e+00> : vector<8x16xf32>
    %98 = tpu.matmul %83, %34, %cst_67 {dimension_numbers = #tpu.dot_dimension_numbers<[1], [0], [0], [1], [0, 0, 1, 1], [], []>} : vector<8x16xf32>, vector<16x16xf32>, vector<8x16xf32> -> vector<8x16xf32>
    %99 = vector.broadcast %40 : vector<1x16xf32> to vector<8x16xf32>
    %100 = arith.addf %98, %99 : vector<8x16xf32>
    %cst_68 = arith.constant dense<0.000000e+00> : vector<8x16xf32>
    %101 = tpu.matmul %83, %36, %cst_68 {dimension_numbers = #tpu.dot_dimension_numbers<[1], [0], [0], [1], [0, 0, 1, 1], [], []>} : vector<8x16xf32>, vector<16x16xf32>, vector<8x16xf32> -> vector<8x16xf32>
    %102 = vector.broadcast %42 : vector<1x16xf32> to vector<8x16xf32>
    %103 = arith.addf %101, %102 : vector<8x16xf32>
    %104 = arith.addf %88, %97 : vector<8x16xf32>
    %105 = arith.negf %104 : vector<8x16xf32>
    %106 = math.exp %105 : vector<8x16xf32>
    %cst_69 = arith.constant 1.000000e+00 : f32
    %107 = vector.broadcast %cst_69 : f32 to vector<8x16xf32>
    %108 = arith.addf %107, %106 : vector<8x16xf32>
    %109 = arith.divf %107, %108 : vector<8x16xf32>
    %110 = arith.addf %91, %100 : vector<8x16xf32>
    %111 = arith.negf %110 : vector<8x16xf32>
    %112 = math.exp %111 : vector<8x16xf32>
    %cst_70 = arith.constant 1.000000e+00 : f32
    %113 = vector.broadcast %cst_70 : f32 to vector<8x16xf32>
    %114 = arith.addf %113, %112 : vector<8x16xf32>
    %115 = arith.divf %113, %114 : vector<8x16xf32>
    %116 = arith.mulf %109, %103 : vector<8x16xf32>
    %117 = arith.addf %94, %116 : vector<8x16xf32>
    %118 = math.tanh %117 : vector<8x16xf32>
    %cst_71 = arith.constant 1.000000e+00 : f32
    %119 = vector.broadcast %cst_71 : f32 to vector<8x16xf32>
    %120 = arith.subf %119, %115 : vector<8x16xf32>
    %121 = arith.mulf %120, %118 : vector<8x16xf32>
    %122 = arith.mulf %115, %83 : vector<8x16xf32>
    %123 = arith.addf %121, %122 : vector<8x16xf32>
    %c2_i32 = arith.constant 2 : i32
    %c0_72 = arith.constant 0 : index
    %c0_73 = arith.constant 0 : index
    %124 = vector.load %arg6[%c0_72, %c0_73] : memref<8x16xf32, #tpu.memory_space<vmem>>, vector<8x16xf32>
    tpu.vector_store %arg6[%c0_72, %c0_73], %123 {strides = array<i32>} : memref<8x16xf32, #tpu.memory_space<vmem>>, vector<8x16xf32>,
    return
  }
  func.func @transform_0(%arg0: i32) -> (i32, i32) {
    %c0_i32 = arith.constant 0 : i32
    %c0_i32_0 = arith.constant 0 : i32
    %c0_i32_1 = arith.constant 0 : i32
    return %c0_i32, %c0_i32_0 : i32, i32
  }
  func.func @transform_1(%arg0: i32) -> (i32, i32, i32) {
    %c0_i32 = arith.constant 0 : i32
    %c0_i32_0 = arith.constant 0 : i32
    %c0_i32_1 = arith.constant 0 : i32
    %c0_i32_2 = arith.constant 0 : i32
    return %c0_i32, %c0_i32_0, %c0_i32_1 : i32, i32, i32
  }
  func.func @transform_2(%arg0: i32) -> (i32, i32, i32) {
    %c0_i32 = arith.constant 0 : i32
    %c0_i32_0 = arith.constant 0 : i32
    %c0_i32_1 = arith.constant 0 : i32
    %c0_i32_2 = arith.constant 0 : i32
    return %c0_i32, %c0_i32_0, %c0_i32_1 : i32, i32, i32
  }
  func.func @transform_3(%arg0: i32) -> (i32, i32, i32) {
    %c0_i32 = arith.constant 0 : i32
    %c0_i32_0 = arith.constant 0 : i32
    %c0_i32_1 = arith.constant 0 : i32
    %c0_i32_2 = arith.constant 0 : i32
    return %c0_i32, %c0_i32_0, %c0_i32_1 : i32, i32, i32
  }
  func.func @transform_4(%arg0: i32) -> (i32, i32, i32) {
    %c0_i32 = arith.constant 0 : i32
    %c0_i32_0 = arith.constant 0 : i32
    %c0_i32_1 = arith.constant 0 : i32
    %c0_i32_2 = arith.constant 0 : i32
    return %c0_i32, %c0_i32_0, %c0_i32_1 : i32, i32, i32
  }
  func.func @transform_5(%arg0: i32) -> (i32, i32) {
    %c0_i32 = arith.constant 0 : i32
    %c0_i32_0 = arith.constant 0 : i32
    %c0_i32_1 = arith.constant 0 : i32
    return %c0_i32, %c0_i32_0 : i32, i32
  }
}

</mosaic_0001>

<llo_original>
// kernel: reference_encoder_forward.4
$region0: #{reference_encoder_forward.4}
  #allocation0 [shape = 'u32[]', space=smem, size = 0x4, offset = 0x4, fixed_abs, tag = 'smem constant byte address 0x4 - core index']
  #allocation1 [shape = 'u32[144,128]{1,0:T(1,128)}', space=vmem, size = 0x12000, scoped, tag = 'internal scratch']
  %s0 = inlined_call_operand.vmem [shape: f32[4,9], index: 0, kind: input, shape index: {}]
  %s1 = inlined_call_operand.vmem [shape: f32[9,128], index: 1, kind: input, shape index: {}]
  %s2 = inlined_call_operand.vmem [shape: f32[4,1], index: 2, kind: input, shape index: {}]
  %s3 = inlined_call_operand.vmem [shape: f32[4,128], index: 3, kind: output, shape index: {}]
  %s4 = sld [smem:[#allocation0]]
  $region22: #{reference_encoder_forward.4} parent=0
    _
  %s6 = ssub.s32 1, %s4
  %s7 = scalar_select 0, %s6, %s4
  // Predicated region
  $region2: #{reference_encoder_forward.4} parent=0 // pred_check
    _
  $region3: #{reference_encoder_forward.4} parent=0 // pred_check_branch
    %9 = sbr.rel (0) target = $region5
  $region4: #{reference_encoder_forward.4} parent=0 // pred_region
    _
  $region5: #{reference_encoder_forward.4} parent=0 // pred_fallthru
    _
  // Predicated region
  $region6: #{reference_encoder_forward.4} parent=0 // pred_check
    _
  $region7: #{reference_encoder_forward.4} parent=0 // pred_check_branch
    %11 = sbr.rel (0) target = $region9
  $region8: #{reference_encoder_forward.4} parent=0 // pred_region
    _
  $region9: #{reference_encoder_forward.4} parent=0 // pred_fallthru
    _
  // Predicated region
  $region10: #{reference_encoder_forward.4} parent=0 // pred_check
    _
  $region11: #{reference_encoder_forward.4} parent=0 // pred_check_branch
    %13 = sbr.rel (0) target = $region13
  $region12: #{reference_encoder_forward.4} parent=0 // pred_region
    _
  $region13: #{reference_encoder_forward.4} parent=0 // pred_fallthru
    _
  %v14 = vld [vmem:[%s0] sm:$0xf]
  %v15 = vld [vmem:[%s1] sm:$0xff]
  %v16 = vld [vmem:[%s1 + $0x8] sm:$0x1]
  %v17 = vld [vmem:[%s2] sm:$0xf]
  %19 = vset.pattern.permute.xlu0 0
  %20 = vperm.xlu0 %19, %v17
  %v21 = vpop.permute.xlu0 %20
  %vm23 = vcmask 72704
  %v25 = vsel %vm23, %v14, 0
  %vm27 = vcmask 1040384
  %v29 = vsel %vm27, %v16, 0
  %31 = vmatprep.subr.mxu0 0.0
  %32 = vmatpush1.msra.mxu0 0.0
  %33 = vmatprep.subr.mxu0 0.0
  %34 = vmatpush1.msra.mxu0 0.0
  %35 = vmatprep.subr.mxu0 0.0
  %36 = vmatpush1.msra.mxu0 0.0
  %37 = vmatprep.subr.mxu0 0.0
  %38 = vmatpush1.msra.mxu0 0.0
  %39 = vmatprep.subr.mxu0 0.0
  %40 = vmatpush1.msra.mxu0 0.0
  %41 = vmatprep.subr.mxu0 0.0
  %42 = vmatpush1.msra.mxu0 0.0
  %43 = vmatprep.subr.mxu0 0.0
  %44 = vmatpush1.msra.mxu0 0.0
  %45 = vmatprep.subr.mxu0 0.0
  %46 = vmatpush1.msra.mxu0 0.0
  %47 = vmatprep.subr.mxu0 0.0
  %48 = vmatpush1.msra.mxu0 0.0
  %49 = vmatprep.subr.mxu0 0.0
  %50 = vmatpush1.msra.mxu0 0.0
  %51 = vmatprep.subr.mxu0 0.0
  %52 = vmatpush1.msra.mxu0 0.0
  %53 = vmatprep.subr.mxu0 0.0
  %54 = vmatpush1.msra.mxu0 0.0
  %55 = vmatprep.subr.mxu0 0.0
  %56 = vmatpush1.msra.mxu0 0.0
  %57 = vmatprep.subr.mxu0 0.0
  %58 = vmatpush1.msra.mxu0 0.0
  %59 = vmatprep.subr.mxu0 0.0
  %60 = vmatpush1.msra.mxu0 %v29
  %61 = vmatprep.subr.mxu0 0.0
  %62 = vmatpush1.msra.mxu0 %v15
  %63 = vmatprep.subr.mxu0 0.0
  %64 = vmatpush2.msra.mxu0 0.0
  %65 = vmatprep.subr.mxu0 0.0
  %66 = vmatpush2.msra.mxu0 0.0
  %67 = vmatprep.subr.mxu0 0.0
  %68 = vmatpush2.msra.mxu0 0.0
  %69 = vmatprep.subr.mxu0 0.0
  %70 = vmatpush2.msra.mxu0 0.0
  %71 = vmatprep.subr.mxu0 0.0
  %72 = vmatpush2.msra.mxu0 0.0
  %73 = vmatprep.subr.mxu0 0.0
  %74 = vmatpush2.msra.mxu0 0.0
  %75 = vmatprep.subr.mxu0 0.0
  %76 = vmatpush2.msra.mxu0 0.0
  %77 = vmatprep.subr.mxu0 0.0
  %78 = vmatpush2.msra.mxu0 0.0
  %79 = vmatprep.subr.mxu0 0.0
  %80 = vmatpush2.msra.mxu0 0.0
  %81 = vmatprep.subr.mxu0 0.0
  %82 = vmatpush2.msra.mxu0 0.0
  %83 = vmatprep.subr.mxu0 0.0
  %84 = vmatpush2.msra.mxu0 0.0
  %85 = vmatprep.subr.mxu0 0.0
  %86 = vmatpush2.msra.mxu0 0.0
  %87 = vmatprep.subr.mxu0 0.0
  %88 = vmatpush2.msra.mxu0 0.0
  %89 = vmatprep.subr.mxu0 0.0
  %90 = vmatpush2.msra.mxu0 0.0
  %91 = vmatprep.subr.mxu0 0.0
  %92 = vmatpush2.msra.mxu0 0.0
  %93 = vmatprep.subr.mxu0 0.0
  %94 = vmatpush2.msra.mxu0 0.0
  %95 = vmatprep.mubr.f32.mxu0 0.0
  %96 = vmatmul.mubr.f32.gmra.mxu0 %v25
  %v97 = vpop.f32.mrf.mxu0
  %v98 = vadd.f32 %v21, %v97
  %v99 = vpop.f32.mrf.mxu0
  %100 = vdwg.mxu0
  %v101 = vmax.f32 %v98, 0.0
  %102 = vst [vmem:[%s3] sm:$0xf] %v101
  // Predicated region
  $region14: #{reference_encoder_forward.4} parent=0 // pred_check
    _
  $region15: #{reference_encoder_forward.4} parent=0 // pred_check_branch
    %104 = sbr.rel (0) target = $region17
  $region16: #{reference_encoder_forward.4} parent=0 // pred_region
    _
  $region17: #{reference_encoder_forward.4} parent=0 // pred_fallthru
    _
  // Predicated region
  $region18: #{reference_encoder_forward.4} parent=0 // pred_check
    _
  $region19: #{reference_encoder_forward.4} parent=0 // pred_check_branch
    %106 = sbr.rel (0) target = $region21
  $region20: #{reference_encoder_forward.4} parent=0 // pred_region
    _
  $region21: #{reference_encoder_forward.4} parent=0 // pred_fallthru
    _

// kernel: reference_encoder_forward.5
$region0: #{reference_encoder_forward.5}
  #allocation0 [shape = 'u32[]', space=smem, size = 0x4, offset = 0x4, fixed_abs, tag = 'smem constant byte address 0x4 - core index']
  #allocation1 [shape = 'u32[144,128]{1,0:T(1,128)}', space=vmem, size = 0x12000, scoped, tag = 'internal scratch']
  %s0 = inlined_call_operand.vmem [shape: f32[8,36], index: 0, kind: input, shape index: {}]
  %s1 = inlined_call_operand.vmem [shape: f32[36,128], index: 1, kind: input, shape index: {}]
  %s2 = inlined_call_operand.vmem [shape: f32[8,1], index: 2, kind: input, shape index: {}]
  %s3 = inlined_call_operand.vmem [shape: f32[8,128], index: 3, kind: output, shape index: {}]
  %s4 = sld [smem:[#allocation0]]
  $region22: #{reference_encoder_forward.5} parent=0
    _
  %s6 = ssub.s32 1, %s4
  %s7 = scalar_select 0, %s6, %s4
  // Predicated region
  $region2: #{reference_encoder_forward.5} parent=0 // pred_check
    _
  $region3: #{reference_encoder_forward.5} parent=0 // pred_check_branch
    %9 = sbr.rel (0) target = $region5
  $region4: #{reference_encoder_forward.5} parent=0 // pred_region
    _
  $region5: #{reference_encoder_forward.5} parent=0 // pred_fallthru
    _
  // Predicated region
  $region6: #{reference_encoder_forward.5} parent=0 // pred_check
    _
  $region7: #{reference_encoder_forward.5} parent=0 // pred_check_branch
    %11 = sbr.rel (0) target = $region9
  $region8: #{reference_encoder_forward.5} parent=0 // pred_region
    _
  $region9: #{reference_encoder_forward.5} parent=0 // pred_fallthru
    _
  // Predicated region
  $region10: #{reference_encoder_forward.5} parent=0 // pred_check
    _
  $region11: #{reference_encoder_forward.5} parent=0 // pred_check_branch
    %13 = sbr.rel (0) target = $region13
  $region12: #{reference_encoder_forward.5} parent=0 // pred_region
    _
  $region13: #{reference_encoder_forward.5} parent=0 // pred_fallthru
    _
  %v14 = vld [vmem:[%s0] sm:$0xff]
  %v15 = vld [vmem:[%s1] sm:$0xff]
  %v16 = vld [vmem:[%s1 + $0x8] sm:$0xff]
  %v17 = vld [vmem:[%s1 + $0x10] sm:$0xff]
  %v18 = vld [vmem:[%s1 + $0x18] sm:$0xff]
  %v19 = vld [vmem:[%s1 + $0x20] sm:$0xf]
  %v20 = vld [vmem:[%s2] sm:$0xff]
  %22 = vset.pattern.permute.xlu0 0
  %23 = vperm.xlu0 %22, %v20
  %v24 = vpop.permute.xlu0 %23
  %vm26 = vcmask 293888
  %v28 = vsel %vm26, %v14, 0
  %vm30 = vcmask 1043456
  %v32 = vsel %vm30, %v19, 0
  %34 = vmatprep.subr.mxu0 0.0
  %35 = vmatpush1.msra.mxu0 0.0
  %36 = vmatprep.subr.mxu0 0.0
  %37 = vmatpush1.msra.mxu0 0.0
  %38 = vmatprep.subr.mxu0 0.0
  %39 = vmatpush1.msra.mxu0 0.0
  %40 = vmatprep.subr.mxu0 0.0
  %41 = vmatpush1.msra.mxu0 0.0
  %42 = vmatprep.subr.mxu0 0.0
  %43 = vmatpush1.msra.mxu0 0.0
  %44 = vmatprep.subr.mxu0 0.0
  %45 = vmatpush1.msra.mxu0 0.0
  %46 = vmatprep.subr.mxu0 0.0
  %47 = vmatpush1.msra.mxu0 0.0
  %48 = vmatprep.subr.mxu0 0.0
  %49 = vmatpush1.msra.mxu0 0.0
  %50 = vmatprep.subr.mxu0 0.0
  %51 = vmatpush1.msra.mxu0 0.0
  %52 = vmatprep.subr.mxu0 0.0
  %53 = vmatpush1.msra.mxu0 0.0
  %54 = vmatprep.subr.mxu0 0.0
  %55 = vmatpush1.msra.mxu0 0.0
  %56 = vmatprep.subr.mxu0 0.0
  %57 = vmatpush1.msra.mxu0 %v32
  %58 = vmatprep.subr.mxu0 0.0
  %59 = vmatpush1.msra.mxu0 %v18
  %60 = vmatprep.subr.mxu0 0.0
  %61 = vmatpush1.msra.mxu0 %v17
  %62 = vmatprep.subr.mxu0 0.0
  %63 = vmatpush1.msra.mxu0 %v16
  %64 = vmatprep.subr.mxu0 0.0
  %65 = vmatpush1.msra.mxu0 %v15
  %66 = vmatprep.subr.mxu0 0.0
  %67 = vmatpush2.msra.mxu0 0.0
  %68 = vmatprep.subr.mxu0 0.0
  %69 = vmatpush2.msra.mxu0 0.0
  %70 = vmatprep.subr.mxu0 0.0
  %71 = vmatpush2.msra.mxu0 0.0
  %72 = vmatprep.subr.mxu0 0.0
  %73 = vmatpush2.msra.mxu0 0.0
  %74 = vmatprep.subr.mxu0 0.0
  %75 = vmatpush2.msra.mxu0 0.0
  %76 = vmatprep.subr.mxu0 0.0
  %77 = vmatpush2.msra.mxu0 0.0
  %78 = vmatprep.subr.mxu0 0.0
  %79 = vmatpush2.msra.mxu0 0.0
  %80 = vmatprep.subr.mxu0 0.0
  %81 = vmatpush2.msra.mxu0 0.0
  %82 = vmatprep.subr.mxu0 0.0
  %83 = vmatpush2.msra.mxu0 0.0
  %84 = vmatprep.subr.mxu0 0.0
  %85 = vmatpush2.msra.mxu0 0.0
  %86 = vmatprep.subr.mxu0 0.0
  %87 = vmatpush2.msra.mxu0 0.0
  %88 = vmatprep.subr.mxu0 0.0
  %89 = vmatpush2.msra.mxu0 0.0
  %90 = vmatprep.subr.mxu0 0.0
  %91 = vmatpush2.msra.mxu0 0.0
  %92 = vmatprep.subr.mxu0 0.0
  %93 = vmatpush2.msra.mxu0 0.0
  %94 = vmatprep.subr.mxu0 0.0
  %95 = vmatpush2.msra.mxu0 0.0
  %96 = vmatprep.subr.mxu0 0.0
  %97 = vmatpush2.msra.mxu0 0.0
  %98 = vmatprep.mubr.f32.mxu0 0.0
  %99 = vmatmul.mubr.f32.gmra.mxu0 %v28
  %v100 = vpop.f32.mrf.mxu0
  %v101 = vadd.f32 %v24, %v100
  %v102 = vpop.f32.mrf.mxu0
  %103 = vdwg.mxu0
  %v104 = vmax.f32 %v101, 0.0
  %105 = vst [vmem:[%s3] sm:$0xff] %v104
  // Predicated region
  $region14: #{reference_encoder_forward.5} parent=0 // pred_check
    _
  $region15: #{reference_encoder_forward.5} parent=0 // pred_check_branch
    %107 = sbr.rel (0) target = $region17
  $region16: #{reference_encoder_forward.5} parent=0 // pred_region
    _
  $region17: #{reference_encoder_forward.5} parent=0 // pred_fallthru
    _
  // Predicated region
  $region18: #{reference_encoder_forward.5} parent=0 // pred_check
    _
  $region19: #{reference_encoder_forward.5} parent=0 // pred_check_branch
    %109 = sbr.rel (0) target = $region21
  $region20: #{reference_encoder_forward.5} parent=0 // pred_region
    _
  $region21: #{reference_encoder_forward.5} parent=0 // pred_fallthru
    _

// kernel: reference_encoder_forward.6
$region0: #{reference_encoder_forward.6}
  #allocation0 [shape = 'u32[]', space=smem, size = 0x4, offset = 0x4, fixed_abs, tag = 'smem constant byte address 0x4 - core index']
  #allocation1 [shape = 'u32[144,128]{1,0:T(1,128)}', space=vmem, size = 0x12000, scoped, tag = 'internal scratch']
  %s0 = inlined_call_operand.vmem [shape: f32[16,72], index: 0, kind: input, shape index: {}]
  %s1 = inlined_call_operand.vmem [shape: f32[72,128], index: 1, kind: input, shape index: {}]
  %s2 = inlined_call_operand.vmem [shape: f32[16,1], index: 2, kind: input, shape index: {}]
  %s3 = inlined_call_operand.vmem [shape: f32[16,128], index: 3, kind: output, shape index: {}]
  %s4 = sld [smem:[#allocation0]]
  $region22: #{reference_encoder_forward.6} parent=0
    _
  %s6 = ssub.s32 1, %s4
  %s7 = scalar_select 0, %s6, %s4
  // Predicated region
  $region2: #{reference_encoder_forward.6} parent=0 // pred_check
    _
  $region3: #{reference_encoder_forward.6} parent=0 // pred_check_branch
    %9 = sbr.rel (0) target = $region5
  $region4: #{reference_encoder_forward.6} parent=0 // pred_region
    _
  $region5: #{reference_encoder_forward.6} parent=0 // pred_fallthru
    _
  // Predicated region
  $region6: #{reference_encoder_forward.6} parent=0 // pred_check
    _
  $region7: #{reference_encoder_forward.6} parent=0 // pred_check_branch
    %11 = sbr.rel (0) target = $region9
  $region8: #{reference_encoder_forward.6} parent=0 // pred_region
    _
  $region9: #{reference_encoder_forward.6} parent=0 // pred_fallthru
    _
  // Predicated region
  $region10: #{reference_encoder_forward.6} parent=0 // pred_check
    _
  $region11: #{reference_encoder_forward.6} parent=0 // pred_check_branch
    %13 = sbr.rel (0) target = $region13
  $region12: #{reference_encoder_forward.6} parent=0 // pred_region
    _
  $region13: #{reference_encoder_forward.6} parent=0 // pred_fallthru
    _
  %v14 = vld [vmem:[%s0] sm:$0xff]
  %v15 = vld [vmem:[%s0 + $0x8] sm:$0xff]
  %v16 = vld [vmem:[%s1] sm:$0xff]
  %v17 = vld [vmem:[%s1 + $0x8] sm:$0xff]
  %v18 = vld [vmem:[%s1 + $0x10] sm:$0xff]
  %v19 = vld [vmem:[%s1 + $0x18] sm:$0xff]
  %v20 = vld [vmem:[%s1 + $0x20] sm:$0xff]
  %v21 = vld [vmem:[%s1 + $0x28] sm:$0xff]
  %v22 = vld [vmem:[%s1 + $0x30] sm:$0xff]
  %v23 = vld [vmem:[%s1 + $0x38] sm:$0xff]
  %v24 = vld [vmem:[%s1 + $0x40] sm:$0xff]
  %v25 = vld [vmem:[%s2] sm:$0xff]
  %v26 = vld [vmem:[%s2 + $0x8] sm:$0xff]
  %28 = vset.pattern.permute.xlu0 0
  %29 = vperm.xlu0 %28, %v25
  %v30 = vpop.permute.xlu0 %29
  %33 = vset.pattern.permute.xlu0 0
  %34 = vperm.xlu0 %33, %v26
  %v35 = vpop.permute.xlu0 %34
  %vm37 = vcmask 588800
  %v39 = vsel %vm37, %v14, 0
  %v42 = vsel %vm37, %v15, 0
  %44 = vmatprep.subr.mxu0 0.0
  %45 = vmatpush1.msra.mxu0 0.0
  %46 = vmatprep.subr.mxu0 0.0
  %47 = vmatpush1.msra.mxu0 0.0
  %48 = vmatprep.subr.mxu0 0.0
  %49 = vmatpush1.msra.mxu0 0.0
  %50 = vmatprep.subr.mxu0 0.0
  %51 = vmatpush1.msra.mxu0 0.0
  %52 = vmatprep.subr.mxu0 0.0
  %53 = vmatpush1.msra.mxu0 0.0
  %54 = vmatprep.subr.mxu0 0.0
  %55 = vmatpush1.msra.mxu0 0.0
  %56 = vmatprep.subr.mxu0 0.0
  %57 = vmatpush1.msra.mxu0 0.0
  %58 = vmatprep.subr.mxu0 0.0
  %59 = vmatpush1.msra.mxu0 %v24
  %60 = vmatprep.subr.mxu0 0.0
  %61 = vmatpush1.msra.mxu0 %v23
  %62 = vmatprep.subr.mxu0 0.0
  %63 = vmatpush1.msra.mxu0 %v22
  %64 = vmatprep.subr.mxu0 0.0
  %65 = vmatpush1.msra.mxu0 %v21
  %66 = vmatprep.subr.mxu0 0.0
  %67 = vmatpush1.msra.mxu0 %v20
  %68 = vmatprep.subr.mxu0 0.0
  %69 = vmatpush1.msra.mxu0 %v19
  %70 = vmatprep.subr.mxu0 0.0
  %71 = vmatpush1.msra.mxu0 %v18
  %72 = vmatprep.subr.mxu0 0.0
  %73 = vmatpush1.msra.mxu0 %v17
  %74 = vmatprep.subr.mxu0 0.0
  %75 = vmatpush1.msra.mxu0 %v16
  %76 = vmatprep.subr.mxu0 0.0
  %77 = vmatpush2.msra.mxu0 0.0
  %78 = vmatprep.subr.mxu0 0.0
  %79 = vmatpush2.msra.mxu0 0.0
  %80 = vmatprep.subr.mxu0 0.0
  %81 = vmatpush2.msra.mxu0 0.0
  %82 = vmatprep.subr.mxu0 0.0
  %83 = vmatpush2.msra.mxu0 0.0
  %84 = vmatprep.subr.mxu0 0.0
  %85 = vmatpush2.msra.mxu0 0.0
  %86 = vmatprep.subr.mxu0 0.0
  %87 = vmatpush2.msra.mxu0 0.0
  %88 = vmatprep.subr.mxu0 0.0
  %89 = vmatpush2.msra.mxu0 0.0
  %90 = vmatprep.subr.mxu0 0.0
  %91 = vmatpush2.msra.mxu0 0.0
  %92 = vmatprep.subr.mxu0 0.0
  %93 = vmatpush2.msra.mxu0 0.0
  %94 = vmatprep.subr.mxu0 0.0
  %95 = vmatpush2.msra.mxu0 0.0
  %96 = vmatprep.subr.mxu0 0.0
  %97 = vmatpush2.msra.mxu0 0.0
  %98 = vmatprep.subr.mxu0 0.0
  %99 = vmatpush2.msra.mxu0 0.0
  %100 = vmatprep.subr.mxu0 0.0
  %101 = vmatpush2.msra.mxu0 0.0
  %102 = vmatprep.subr.mxu0 0.0
  %103 = vmatpush2.msra.mxu0 0.0
  %104 = vmatprep.subr.mxu0 0.0
  %105 = vmatpush2.msra.mxu0 0.0
  %106 = vmatprep.subr.mxu0 0.0
  %107 = vmatpush2.msra.mxu0 0.0
  %108 = vmatprep.mubr.f32.mxu0 0.0
  %109 = vmatmul.mubr.f32.gmra.mxu0 %v39
  %v110 = vpop.f32.mrf.mxu0
  %v111 = vadd.f32 %v30, %v110
  %v112 = vpop.f32.mrf.mxu0
  %113 = vmatprep.mubr.f32.mxu0 0.0
  %114 = vmatmul.mubr.f32.gmra.mxu0 %v42
  %v115 = vpop.f32.mrf.mxu0
  %v116 = vadd.f32 %v35, %v115
  %v117 = vpop.f32.mrf.mxu0
  %118 = vdwg.mxu0
  %v119 = vmax.f32 %v111, 0.0
  %v120 = vmax.f32 %v116, 0.0
  %121 = vst [vmem:[%s3] sm:$0xff] %v119
  %122 = vst [vmem:[%s3 + $0x8] sm:$0xff] %v120
  // Predicated region
  $region14: #{reference_encoder_forward.6} parent=0 // pred_check
    _
  $region15: #{reference_encoder_forward.6} parent=0 // pred_check_branch
    %124 = sbr.rel (0) target = $region17
  $region16: #{reference_encoder_forward.6} parent=0 // pred_region
    _
  $region17: #{reference_encoder_forward.6} parent=0 // pred_fallthru
    _
  // Predicated region
  $region18: #{reference_encoder_forward.6} parent=0 // pred_check
    _
  $region19: #{reference_encoder_forward.6} parent=0 // pred_check_branch
    %126 = sbr.rel (0) target = $region21
  $region20: #{reference_encoder_forward.6} parent=0 // pred_region
    _
  $region21: #{reference_encoder_forward.6} parent=0 // pred_fallthru
    _

// kernel: reference_encoder_forward.7
$region0: #{reference_encoder_forward.7}
  #allocation0 [shape = 'u32[]', space=smem, size = 0x4, offset = 0x4, fixed_abs, tag = 'smem constant byte address 0x4 - core index']
  #allocation1 [shape = 'u32[144,128]{1,0:T(1,128)}', space=vmem, size = 0x12000, scoped, tag = 'internal scratch']
  #allocation2 [shape = 'f32[3,16,16]{2,1,0:T(8,128)}', space=vmem, size = 0x6000, scoped, tag = 'scratch operand']
  %s0 = inlined_call_operand.vmem [shape: f32[16,32], index: 0, kind: input, shape index: {}]
  %s1 = inlined_call_operand.vmem [shape: f32[3,32,16], index: 1, kind: input, shape index: {}]
  %s2 = inlined_call_operand.vmem [shape: f32[3,16,16], index: 2, kind: input, shape index: {}]
  %s3 = inlined_call_operand.vmem [shape: f32[3,1,16], index: 3, kind: input, shape index: {}]
  %s4 = inlined_call_operand.vmem [shape: f32[3,1,16], index: 4, kind: input, shape index: {}]
  %s5 = inlined_call_operand.vmem [shape: f32[8,16], index: 5, kind: output, shape index: {}]
  %s6 = sld [smem:[#allocation0]]
  $region30: #{reference_encoder_forward.7} parent=0
    _
  %s8 = ssub.s32 1, %s6
  %s9 = scalar_select 0, %s8, %s6
  // Predicated region
  $region2: #{reference_encoder_forward.7} parent=0 // pred_check
    _
  $region3: #{reference_encoder_forward.7} parent=0 // pred_check_branch
    %11 = sbr.rel (0) target = $region5
  $region4: #{reference_encoder_forward.7} parent=0 // pred_region
    _
  $region5: #{reference_encoder_forward.7} parent=0 // pred_fallthru
    _
  // Predicated region
  $region6: #{reference_encoder_forward.7} parent=0 // pred_check
    _
  $region7: #{reference_encoder_forward.7} parent=0 // pred_check_branch
    %13 = sbr.rel (0) target = $region9
  $region8: #{reference_encoder_forward.7} parent=0 // pred_region
    _
  $region9: #{reference_encoder_forward.7} parent=0 // pred_fallthru
    _
  // Predicated region
  $region10: #{reference_encoder_forward.7} parent=0 // pred_check
    _
  $region11: #{reference_encoder_forward.7} parent=0 // pred_check_branch
    %15 = sbr.rel (0) target = $region13
  $region12: #{reference_encoder_forward.7} parent=0 // pred_region
    _
  $region13: #{reference_encoder_forward.7} parent=0 // pred_fallthru
    _
  // Predicated region
  $region14: #{reference_encoder_forward.7} parent=0 // pred_check
    _
  $region15: #{reference_encoder_forward.7} parent=0 // pred_check_branch
    %17 = sbr.rel (0) target = $region17
  $region16: #{reference_encoder_forward.7} parent=0 // pred_region
    _
  $region17: #{reference_encoder_forward.7} parent=0 // pred_fallthru
    _
  // Predicated region
  $region18: #{reference_encoder_forward.7} parent=0 // pred_check
    _
  $region19: #{reference_encoder_forward.7} parent=0 // pred_check_branch
    %19 = sbr.rel (0) target = $region21
  $region20: #{reference_encoder_forward.7} parent=0 // pred_region
    _
  $region21: #{reference_encoder_forward.7} parent=0 // pred_fallthru
    _
  %v20 = vld [vmem:[%s0] sm:$0xff]
  %v21 = vld [vmem:[%s0 + $0x8] sm:$0xff]
  %v22 = vld [vmem:[%s1] sm:$0xff]
  %v23 = vld [vmem:[%s1 + $0x8] sm:$0xff]
  %v24 = vld [vmem:[%s1 + $0x10] sm:$0xff]
  %v25 = vld [vmem:[%s1 + $0x18] sm:$0xff]
  %v26 = vld [vmem:[%s3] sm:$0x1]
  %v28 = vlaneseq
  %v29 = vshrl.u32 %v28, 7
  %v30 = vsub.s32 0, %v29
  %v31 = vrot.slane %v26, %v30
  %vm33 = vcmask 261120
  %v35 = vsel %vm33, %v20, 0
  %v38 = vsel %vm33, %v21, 0
  %40 = vmatprep.subr.mxu0 0.0
  %41 = vmatpush1.msra.mxu0 0.0
  %42 = vmatprep.subr.mxu0 0.0
  %43 = vmatpush1.msra.mxu0 0.0
  %44 = vmatprep.subr.mxu0 0.0
  %45 = vmatpush1.msra.mxu0 0.0
  %46 = vmatprep.subr.mxu0 0.0
  %47 = vmatpush1.msra.mxu0 0.0
  %48 = vmatprep.subr.mxu0 0.0
  %49 = vmatpush1.msra.mxu0 0.0
  %50 = vmatprep.subr.mxu0 0.0
  %51 = vmatpush1.msra.mxu0 0.0
  %52 = vmatprep.subr.mxu0 0.0
  %53 = vmatpush1.msra.mxu0 0.0
  %54 = vmatprep.subr.mxu0 0.0
  %55 = vmatpush1.msra.mxu0 0.0
  %56 = vmatprep.subr.mxu0 0.0
  %57 = vmatpush1.msra.mxu0 0.0
  %58 = vmatprep.subr.mxu0 0.0
  %59 = vmatpush1.msra.mxu0 0.0
  %60 = vmatprep.subr.mxu0 0.0
  %61 = vmatpush1.msra.mxu0 0.0
  %62 = vmatprep.subr.mxu0 0.0
  %63 = vmatpush1.msra.mxu0 0.0
  %64 = vmatprep.subr.mxu0 0.0
  %65 = vmatpush1.msra.mxu0 %v25
  %66 = vmatprep.subr.mxu0 0.0
  %67 = vmatpush1.msra.mxu0 %v24
  %68 = vmatprep.subr.mxu0 0.0
  %69 = vmatpush1.msra.mxu0 %v23
  %70 = vmatprep.subr.mxu0 0.0
  %71 = vmatpush1.msra.mxu0 %v22
  %72 = vmatprep.subr.mxu0 0.0
  %73 = vmatpush2.msra.mxu0 0.0
  %74 = vmatprep.subr.mxu0 0.0
  %75 = vmatpush2.msra.mxu0 0.0
  %76 = vmatprep.subr.mxu0 0.0
  %77 = vmatpush2.msra.mxu0 0.0
  %78 = vmatprep.subr.mxu0 0.0
  %79 = vmatpush2.msra.mxu0 0.0
  %80 = vmatprep.subr.mxu0 0.0
  %81 = vmatpush2.msra.mxu0 0.0
  %82 = vmatprep.subr.mxu0 0.0
  %83 = vmatpush2.msra.mxu0 0.0
  %84 = vmatprep.subr.mxu0 0.0
  %85 = vmatpush2.msra.mxu0 0.0
  %86 = vmatprep.subr.mxu0 0.0
  %87 = vmatpush2.msra.mxu0 0.0
  %88 = vmatprep.subr.mxu0 0.0
  %89 = vmatpush2.msra.mxu0 0.0
  %90 = vmatprep.subr.mxu0 0.0
  %91 = vmatpush2.msra.mxu0 0.0
  %92 = vmatprep.subr.mxu0 0.0
  %93 = vmatpush2.msra.mxu0 0.0
  %94 = vmatprep.subr.mxu0 0.0
  %95 = vmatpush2.msra.mxu0 0.0
  %96 = vmatprep.subr.mxu0 0.0
  %97 = vmatpush2.msra.mxu0 0.0
  %98 = vmatprep.subr.mxu0 0.0
  %99 = vmatpush2.msra.mxu0 0.0
  %100 = vmatprep.subr.mxu0 0.0
  %101 = vmatpush2.msra.mxu0 0.0
  %102 = vmatprep.subr.mxu0 0.0
  %103 = vmatpush2.msra.mxu0 0.0
  %104 = vmatprep.mubr.f32.mxu0 0.0
  %105 = vmatmul.mubr.f32.gmra.mxu0 %v35
  %v106 = vpop.f32.mrf.mxu0
  %v107 = vadd.f32 %v31, %v106
  %v108 = vpop.f32.mrf.mxu0
  %109 = vmatprep.mubr.f32.mxu0 0.0
  %110 = vmatmul.mubr.f32.gmra.mxu0 %v38
  %v111 = vpop.f32.mrf.mxu0
  %v112 = vadd.f32 %v31, %v111
  %v113 = vpop.f32.mrf.mxu0
  %114 = vdwg.mxu0
  %vm115 = vcmask 130048
  %116 = vst.msk [vmem:[#allocation2] sm:$0xff] %vm115, %v107
  %117 = vst.msk [vmem:[#allocation2 + $0x8] sm:$0xff] %vm115, %v112
  %s118 = scalar_lea.vmem %s1, 32
  %v119 = vld [vmem:[%s118] sm:$0xff]
  %v120 = vld [vmem:[%s118 + $0x8] sm:$0xff]
  %v121 = vld [vmem:[%s118 + $0x10] sm:$0xff]
  %v122 = vld [vmem:[%s118 + $0x18] sm:$0xff]
  %s123 = scalar_lea.vmem %s3, 1
  %v124 = vld [vmem:[%s123] sm:$0x1]
  %v126 = vlaneseq
  %v127 = vshrl.u32 %v126, 7
  %v128 = vsub.s32 0, %v127
  %v129 = vrot.slane %v124, %v128
  %131 = vmatprep.subr.mxu0 0.0
  %132 = vmatpush1.msra.mxu0 0.0
  %133 = vmatprep.subr.mxu0 0.0
  %134 = vmatpush1.msra.mxu0 0.0
  %135 = vmatprep.subr.mxu0 0.0
  %136 = vmatpush1.msra.mxu0 0.0
  %137 = vmatprep.subr.mxu0 0.0
  %138 = vmatpush1.msra.mxu0 0.0
  %139 = vmatprep.subr.mxu0 0.0
  %140 = vmatpush1.msra.mxu0 0.0
  %141 = vmatprep.subr.mxu0 0.0
  %142 = vmatpush1.msra.mxu0 0.0
  %143 = vmatprep.subr.mxu0 0.0
  %144 = vmatpush1.msra.mxu0 0.0
  %145 = vmatprep.subr.mxu0 0.0
  %146 = vmatpush1.msra.mxu0 0.0
  %147 = vmatprep.subr.mxu0 0.0
  %148 = vmatpush1.msra.mxu0 0.0
  %149 = vmatprep.subr.mxu0 0.0
  %150 = vmatpush1.msra.mxu0 0.0
  %151 = vmatprep.subr.mxu0 0.0
  %152 = vmatpush1.msra.mxu0 0.0
  %153 = vmatprep.subr.mxu0 0.0
  %154 = vmatpush1.msra.mxu0 0.0
  %155 = vmatprep.subr.mxu0 0.0
  %156 = vmatpush1.msra.mxu0 %v122
  %157 = vmatprep.subr.mxu0 0.0
  %158 = vmatpush1.msra.mxu0 %v121
  %159 = vmatprep.subr.mxu0 0.0
  %160 = vmatpush1.msra.mxu0 %v120
  %161 = vmatprep.subr.mxu0 0.0
  %162 = vmatpush1.msra.mxu0 %v119
  %163 = vmatprep.subr.mxu0 0.0
  %164 = vmatpush2.msra.mxu0 0.0
  %165 = vmatprep.subr.mxu0 0.0
  %166 = vmatpush2.msra.mxu0 0.0
  %167 = vmatprep.subr.mxu0 0.0
  %168 = vmatpush2.msra.mxu0 0.0
  %169 = vmatprep.subr.mxu0 0.0
  %170 = vmatpush2.msra.mxu0 0.0
  %171 = vmatprep.subr.mxu0 0.0
  %172 = vmatpush2.msra.mxu0 0.0
  %173 = vmatprep.subr.mxu0 0.0
  %174 = vmatpush2.msra.mxu0 0.0
  %175 = vmatprep.subr.mxu0 0.0
  %176 = vmatpush2.msra.mxu0 0.0
  %177 = vmatprep.subr.mxu0 0.0
  %178 = vmatpush2.msra.mxu0 0.0
  %179 = vmatprep.subr.mxu0 0.0
  %180 = vmatpush2.msra.mxu0 0.0
  %181 = vmatprep.subr.mxu0 0.0
  %182 = vmatpush2.msra.mxu0 0.0
  %183 = vmatprep.subr.mxu0 0.0
  %184 = vmatpush2.msra.mxu0 0.0
  %185 = vmatprep.subr.mxu0 0.0
  %186 = vmatpush2.msra.mxu0 0.0
  %187 = vmatprep.subr.mxu0 0.0
  %188 = vmatpush2.msra.mxu0 0.0
  %189 = vmatprep.subr.mxu0 0.0
  %190 = vmatpush2.msra.mxu0 0.0
  %191 = vmatprep.subr.mxu0 0.0
  %192 = vmatpush2.msra.mxu0 0.0
  %193 = vmatprep.subr.mxu0 0.0
  %194 = vmatpush2.msra.mxu0 0.0
  %195 = vmatprep.mubr.f32.mxu0 0.0
  %196 = vmatmul.mubr.f32.gmra.mxu0 %v35
  %v197 = vpop.f32.mrf.mxu0
  %v198 = vadd.f32 %v129, %v197
  %v199 = vpop.f32.mrf.mxu0
  %200 = vmatprep.mubr.f32.mxu0 0.0
  %201 = vmatmul.mubr.f32.gmra.mxu0 %v38
  %v202 = vpop.f32.mrf.mxu0
  %v203 = vadd.f32 %v129, %v202
  %v204 = vpop.f32.mrf.mxu0
  %205 = vdwg.mxu0
  %s206 = scalar_lea.vmem [#allocation2], 16
  %207 = vst.msk [vmem:[%s206] sm:$0xff] %vm115, %v198
  %208 = vst.msk [vmem:[%s206 + $0x8] sm:$0xff] %vm115, %v203
  %s209 = scalar_lea.vmem %s1, 64
  %v210 = vld [vmem:[%s209] sm:$0xff]
  %v211 = vld [vmem:[%s209 + $0x8] sm:$0xff]
  %v212 = vld [vmem:[%s209 + $0x10] sm:$0xff]
  %v213 = vld [vmem:[%s209 + $0x18] sm:$0xff]
  %s214 = scalar_lea.vmem %s3, 2
  %v215 = vld [vmem:[%s214] sm:$0x1]
  %v217 = vlaneseq
  %v218 = vshrl.u32 %v217, 7
  %v219 = vsub.s32 0, %v218
  %v220 = vrot.slane %v215, %v219
  %222 = vmatprep.subr.mxu0 0.0
  %223 = vmatpush1.msra.mxu0 0.0
  %224 = vmatprep.subr.mxu0 0.0
  %225 = vmatpush1.msra.mxu0 0.0
  %226 = vmatprep.subr.mxu0 0.0
  %227 = vmatpush1.msra.mxu0 0.0
  %228 = vmatprep.subr.mxu0 0.0
  %229 = vmatpush1.msra.mxu0 0.0
  %230 = vmatprep.subr.mxu0 0.0
  %231 = vmatpush1.msra.mxu0 0.0
  %232 = vmatprep.subr.mxu0 0.0
  %233 = vmatpush1.msra.mxu0 0.0
  %234 = vmatprep.subr.mxu0 0.0
  %235 = vmatpush1.msra.mxu0 0.0
  %236 = vmatprep.subr.mxu0 0.0
  %237 = vmatpush1.msra.mxu0 0.0
  %238 = vmatprep.subr.mxu0 0.0
  %239 = vmatpush1.msra.mxu0 0.0
  %240 = vmatprep.subr.mxu0 0.0
  %241 = vmatpush1.msra.mxu0 0.0
  %242 = vmatprep.subr.mxu0 0.0
  %243 = vmatpush1.msra.mxu0 0.0
  %244 = vmatprep.subr.mxu0 0.0
  %245 = vmatpush1.msra.mxu0 0.0
  %246 = vmatprep.subr.mxu0 0.0
  %247 = vmatpush1.msra.mxu0 %v213
  %248 = vmatprep.subr.mxu0 0.0
  %249 = vmatpush1.msra.mxu0 %v212
  %250 = vmatprep.subr.mxu0 0.0
  %251 = vmatpush1.msra.mxu0 %v211
  %252 = vmatprep.subr.mxu0 0.0
  %253 = vmatpush1.msra.mxu0 %v210
  %254 = vmatprep.subr.mxu0 0.0
  %255 = vmatpush2.msra.mxu0 0.0
  %256 = vmatprep.subr.mxu0 0.0
  %257 = vmatpush2.msra.mxu0 0.0
  %258 = vmatprep.subr.mxu0 0.0
  %259 = vmatpush2.msra.mxu0 0.0
  %260 = vmatprep.subr.mxu0 0.0
  %261 = vmatpush2.msra.mxu0 0.0
  %262 = vmatprep.subr.mxu0 0.0
  %263 = vmatpush2.msra.mxu0 0.0
  %264 = vmatprep.subr.mxu0 0.0
  %265 = vmatpush2.msra.mxu0 0.0
  %266 = vmatprep.subr.mxu0 0.0
  %267 = vmatpush2.msra.mxu0 0.0
  %268 = vmatprep.subr.mxu0 0.0
  %269 = vmatpush2.msra.mxu0 0.0
  %270 = vmatprep.subr.mxu0 0.0
  %271 = vmatpush2.msra.mxu0 0.0
  %272 = vmatprep.subr.mxu0 0.0
  %273 = vmatpush2.msra.mxu0 0.0
  %274 = vmatprep.subr.mxu0 0.0
  %275 = vmatpush2.msra.mxu0 0.0
  %276 = vmatprep.subr.mxu0 0.0
  %277 = vmatpush2.msra.mxu0 0.0
  %278 = vmatprep.subr.mxu0 0.0
  %279 = vmatpush2.msra.mxu0 0.0
  %280 = vmatprep.subr.mxu0 0.0
  %281 = vmatpush2.msra.mxu0 0.0
  %282 = vmatprep.subr.mxu0 0.0
  %283 = vmatpush2.msra.mxu0 0.0
  %284 = vmatprep.subr.mxu0 0.0
  %285 = vmatpush2.msra.mxu0 0.0
  %286 = vmatprep.mubr.f32.mxu0 0.0
  %287 = vmatmul.mubr.f32.gmra.mxu0 %v35
  %v288 = vpop.f32.mrf.mxu0
  %v289 = vadd.f32 %v220, %v288
  %v290 = vpop.f32.mrf.mxu0
  %291 = vmatprep.mubr.f32.mxu0 0.0
  %292 = vmatmul.mubr.f32.gmra.mxu0 %v38
  %v293 = vpop.f32.mrf.mxu0
  %v294 = vadd.f32 %v220, %v293
  %v295 = vpop.f32.mrf.mxu0
  %296 = vdwg.mxu0
  %s297 = scalar_lea.vmem [#allocation2], 32
  %298 = vst.msk [vmem:[%s297] sm:$0xff] %vm115, %v289
  %299 = vst.msk [vmem:[%s297 + $0x8] sm:$0xff] %vm115, %v294
  %v300 = vld [vmem:[%s2] sm:$0xff]
  %v301 = vld [vmem:[%s2 + $0x8] sm:$0xff]
  %s302 = scalar_lea.vmem %s2, 16
  %v303 = vld [vmem:[%s302] sm:$0xff]
  %v304 = vld [vmem:[%s302 + $0x8] sm:$0xff]
  %s305 = scalar_lea.vmem %s2, 32
  %v306 = vld [vmem:[%s305] sm:$0xff]
  %v307 = vld [vmem:[%s305 + $0x8] sm:$0xff]
  %v308 = vld [vmem:[%s4] sm:$0x1]
  %s309 = scalar_lea.vmem %s4, 1
  %v310 = vld [vmem:[%s309] sm:$0x1]
  %s311 = scalar_lea.vmem %s4, 2
  %v312 = vld [vmem:[%s311] sm:$0x1]
  %v313 = vld [vmem:[#allocation2] sm:$0xff]
  %s314 = sadd.s32 0, 16
  %s315 = scalar_lea.vmem [#allocation2], %s314
  %v316 = vld [vmem:[%s315] sm:$0xff]
  %s317 = sadd.s32 0, 32
  %s318 = scalar_lea.vmem [#allocation2], %s317
  %v319 = vld [vmem:[%s318] sm:$0xff]
  %v321 = vlaneseq
  %v322 = vshrl.u32 %v321, 7
  %v323 = vsub.s32 0, %v322
  %v324 = vrot.slane %v308, %v323
  %v327 = vsel %vm115, 0.0, 0
  %329 = vmatprep.subr.mxu0 0.0
  %330 = vmatpush1.msra.mxu0 0.0
  %331 = vmatprep.subr.mxu0 0.0
  %332 = vmatpush1.msra.mxu0 0.0
  %333 = vmatprep.subr.mxu0 0.0
  %334 = vmatpush1.msra.mxu0 0.0
  %335 = vmatprep.subr.mxu0 0.0
  %336 = vmatpush1.msra.mxu0 0.0
  %337 = vmatprep.subr.mxu0 0.0
  %338 = vmatpush1.msra.mxu0 0.0
  %339 = vmatprep.subr.mxu0 0.0
  %340 = vmatpush1.msra.mxu0 0.0
  %341 = vmatprep.subr.mxu0 0.0
  %342 = vmatpush1.msra.mxu0 0.0
  %343 = vmatprep.subr.mxu0 0.0
  %344 = vmatpush1.msra.mxu0 0.0
  %345 = vmatprep.subr.mxu0 0.0
  %346 = vmatpush1.msra.mxu0 0.0
  %347 = vmatprep.subr.mxu0 0.0
  %348 = vmatpush1.msra.mxu0 0.0
  %349 = vmatprep.subr.mxu0 0.0
  %350 = vmatpush1.msra.mxu0 0.0
  %351 = vmatprep.subr.mxu0 0.0
  %352 = vmatpush1.msra.mxu0 0.0
  %353 = vmatprep.subr.mxu0 0.0
  %354 = vmatpush1.msra.mxu0 0.0
  %355 = vmatprep.subr.mxu0 0.0
  %356 = vmatpush1.msra.mxu0 0.0
  %357 = vmatprep.subr.mxu0 0.0
  %358 = vmatpush1.msra.mxu0 %v301
  %359 = vmatprep.subr.mxu0 0.0
  %360 = vmatpush1.msra.mxu0 %v300
  %361 = vmatprep.subr.mxu0 0.0
  %362 = vmatpush2.msra.mxu0 0.0
  %363 = vmatprep.subr.mxu0 0.0
  %364 = vmatpush2.msra.mxu0 0.0
  %365 = vmatprep.subr.mxu0 0.0
  %366 = vmatpush2.msra.mxu0 0.0
  %367 = vmatprep.subr.mxu0 0.0
  %368 = vmatpush2.msra.mxu0 0.0
  %369 = vmatprep.subr.mxu0 0.0
  %370 = vmatpush2.msra.mxu0 0.0
  %371 = vmatprep.subr.mxu0 0.0
  %372 = vmatpush2.msra.mxu0 0.0
  %373 = vmatprep.subr.mxu0 0.0
  %374 = vmatpush2.msra.mxu0 0.0
  %375 = vmatprep.subr.mxu0 0.0
  %376 = vmatpush2.msra.mxu0 0.0
  %377 = vmatprep.subr.mxu0 0.0
  %378 = vmatpush2.msra.mxu0 0.0
  %379 = vmatprep.subr.mxu0 0.0
  %380 = vmatpush2.msra.mxu0 0.0
  %381 = vmatprep.subr.mxu0 0.0
  %382 = vmatpush2.msra.mxu0 0.0
  %383 = vmatprep.subr.mxu0 0.0
  %384 = vmatpush2.msra.mxu0 0.0
  %385 = vmatprep.subr.mxu0 0.0
  %386 = vmatpush2.msra.mxu0 0.0
  %387 = vmatprep.subr.mxu0 0.0
  %388 = vmatpush2.msra.mxu0 0.0
  %389 = vmatprep.subr.mxu0 0.0
  %390 = vmatpush2.msra.mxu0 0.0
  %391 = vmatprep.subr.mxu0 0.0
  %392 = vmatpush2.msra.mxu0 0.0
  %393 = vmatprep.mubr.f32.mxu0 0.0
  %394 = vmatmul.mubr.f32.gmra.mxu0 %v327
  %v395 = vpop.f32.mrf.mxu0
  %v396 = vadd.f32 %v324, %v395
  %v397 = vpop.f32.mrf.mxu0
  %398 = vdwg.mxu0
  %v400 = vlaneseq
  %v401 = vshrl.u32 %v400, 7
  %v402 = vsub.s32 0, %v401
  %v403 = vrot.slane %v310, %v402
  %405 = vmatprep.subr.mxu0 0.0
  %406 = vmatpush1.msra.mxu0 0.0
  %407 = vmatprep.subr.mxu0 0.0
  %408 = vmatpush1.msra.mxu0 0.0
  %409 = vmatprep.subr.mxu0 0.0
  %410 = vmatpush1.msra.mxu0 0.0
  %411 = vmatprep.subr.mxu0 0.0
  %412 = vmatpush1.msra.mxu0 0.0
  %413 = vmatprep.subr.mxu0 0.0
  %414 = vmatpush1.msra.mxu0 0.0
  %415 = vmatprep.subr.mxu0 0.0
  %416 = vmatpush1.msra.mxu0 0.0
  %417 = vmatprep.subr.mxu0 0.0
  %418 = vmatpush1.msra.mxu0 0.0
  %419 = vmatprep.subr.mxu0 0.0
  %420 = vmatpush1.msra.mxu0 0.0
  %421 = vmatprep.subr.mxu0 0.0
  %422 = vmatpush1.msra.mxu0 0.0
  %423 = vmatprep.subr.mxu0 0.0
  %424 = vmatpush1.msra.mxu0 0.0
  %425 = vmatprep.subr.mxu0 0.0
  %426 = vmatpush1.msra.mxu0 0.0
  %427 = vmatprep.subr.mxu0 0.0
  %428 = vmatpush1.msra.mxu0 0.0
  %429 = vmatprep.subr.mxu0 0.0
  %430 = vmatpush1.msra.mxu0 0.0
  %431 = vmatprep.subr.mxu0 0.0
  %432 = vmatpush1.msra.mxu0 0.0
  %433 = vmatprep.subr.mxu0 0.0
  %434 = vmatpush1.msra.mxu0 %v304
  %435 = vmatprep.subr.mxu0 0.0
  %436 = vmatpush1.msra.mxu0 %v303
  %437 = vmatprep.subr.mxu0 0.0
  %438 = vmatpush2.msra.mxu0 0.0
  %439 = vmatprep.subr.mxu0 0.0
  %440 = vmatpush2.msra.mxu0 0.0
  %441 = vmatprep.subr.mxu0 0.0
  %442 = vmatpush2.msra.mxu0 0.0
  %443 = vmatprep.subr.mxu0 0.0
  %444 = vmatpush2.msra.mxu0 0.0
  %445 = vmatprep.subr.mxu0 0.0
  %446 = vmatpush2.msra.mxu0 0.0
  %447 = vmatprep.subr.mxu0 0.0
  %448 = vmatpush2.msra.mxu0 0.0
  %449 = vmatprep.subr.mxu0 0.0
  %450 = vmatpush2.msra.mxu0 0.0
  %451 = vmatprep.subr.mxu0 0.0
  %452 = vmatpush2.msra.mxu0 0.0
  %453 = vmatprep.subr.mxu0 0.0
  %454 = vmatpush2.msra.mxu0 0.0
  %455 = vmatprep.subr.mxu0 0.0
  %456 = vmatpush2.msra.mxu0 0.0
  %457 = vmatprep.subr.mxu0 0.0
  %458 = vmatpush2.msra.mxu0 0.0
  %459 = vmatprep.subr.mxu0 0.0
  %460 = vmatpush2.msra.mxu0 0.0
  %461 = vmatprep.subr.mxu0 0.0
  %462 = vmatpush2.msra.mxu0 0.0
  %463 = vmatprep.subr.mxu0 0.0
  %464 = vmatpush2.msra.mxu0 0.0
  %465 = vmatprep.subr.mxu0 0.0
  %466 = vmatpush2.msra.mxu0 0.0
  %467 = vmatprep.subr.mxu0 0.0
  %468 = vmatpush2.msra.mxu0 0.0
  %469 = vmatprep.mubr.f32.mxu0 0.0
  %470 = vmatmul.mubr.f32.gmra.mxu0 %v327
  %v471 = vpop.f32.mrf.mxu0
  %v472 = vadd.f32 %v403, %v471
  %v473 = vpop.f32.mrf.mxu0
  %474 = vdwg.mxu0
  %v476 = vlaneseq
  %v477 = vshrl.u32 %v476, 7
  %v478 = vsub.s32 0, %v477
  %v479 = vrot.slane %v312, %v478
  %481 = vmatprep.subr.mxu0 0.0
  %482 = vmatpush1.msra.mxu0 0.0
  %483 = vmatprep.subr.mxu0 0.0
  %484 = vmatpush1.msra.mxu0 0.0
  %485 = vmatprep.subr.mxu0 0.0
  %486 = vmatpush1.msra.mxu0 0.0
  %487 = vmatprep.subr.mxu0 0.0
  %488 = vmatpush1.msra.mxu0 0.0
  %489 = vmatprep.subr.mxu0 0.0
  %490 = vmatpush1.msra.mxu0 0.0
  %491 = vmatprep.subr.mxu0 0.0
  %492 = vmatpush1.msra.mxu0 0.0
  %493 = vmatprep.subr.mxu0 0.0
  %494 = vmatpush1.msra.mxu0 0.0
  %495 = vmatprep.subr.mxu0 0.0
  %496 = vmatpush1.msra.mxu0 0.0
  %497 = vmatprep.subr.mxu0 0.0
  %498 = vmatpush1.msra.mxu0 0.0
  %499 = vmatprep.subr.mxu0 0.0
  %500 = vmatpush1.msra.mxu0 0.0
  %501 = vmatprep.subr.mxu0 0.0
  %502 = vmatpush1.msra.mxu0 0.0
  %503 = vmatprep.subr.mxu0 0.0
  %504 = vmatpush1.msra.mxu0 0.0
  %505 = vmatprep.subr.mxu0 0.0
  %506 = vmatpush1.msra.mxu0 0.0
  %507 = vmatprep.subr.mxu0 0.0
  %508 = vmatpush1.msra.mxu0 0.0
  %509 = vmatprep.subr.mxu0 0.0
  %510 = vmatpush1.msra.mxu0 %v307
  %511 = vmatprep.subr.mxu0 0.0
  %512 = vmatpush1.msra.mxu0 %v306
  %513 = vmatprep.subr.mxu0 0.0
  %514 = vmatpush2.msra.mxu0 0.0
  %515 = vmatprep.subr.mxu0 0.0
  %516 = vmatpush2.msra.mxu0 0.0
  %517 = vmatprep.subr.mxu0 0.0
  %518 = vmatpush2.msra.mxu0 0.0
  %519 = vmatprep.subr.mxu0 0.0
  %520 = vmatpush2.msra.mxu0 0.0
  %521 = vmatprep.subr.mxu0 0.0
  %522 = vmatpush2.msra.mxu0 0.0
  %523 = vmatprep.subr.mxu0 0.0
  %524 = vmatpush2.msra.mxu0 0.0
  %525 = vmatprep.subr.mxu0 0.0
  %526 = vmatpush2.msra.mxu0 0.0
  %527 = vmatprep.subr.mxu0 0.0
  %528 = vmatpush2.msra.mxu0 0.0
  %529 = vmatprep.subr.mxu0 0.0
  %530 = vmatpush2.msra.mxu0 0.0
  %531 = vmatprep.subr.mxu0 0.0
  %532 = vmatpush2.msra.mxu0 0.0
  %533 = vmatprep.subr.mxu0 0.0
  %534 = vmatpush2.msra.mxu0 0.0
  %535 = vmatprep.subr.mxu0 0.0
  %536 = vmatpush2.msra.mxu0 0.0
  %537 = vmatprep.subr.mxu0 0.0
  %538 = vmatpush2.msra.mxu0 0.0
  %539 = vmatprep.subr.mxu0 0.0
  %540 = vmatpush2.msra.mxu0 0.0
  %541 = vmatprep.subr.mxu0 0.0
  %542 = vmatpush2.msra.mxu0 0.0
  %543 = vmatprep.subr.mxu0 0.0
  %544 = vmatpush2.msra.mxu0 0.0
  %545 = vmatprep.mubr.f32.mxu0 0.0
  %546 = vmatmul.mubr.f32.gmra.mxu0 %v327
  %v547 = vpop.f32.mrf.mxu0
  %v548 = vadd.f32 %v479, %v547
  %v549 = vpop.f32.mrf.mxu0
  %550 = vdwg.mxu0
  %v551 = vadd.f32 %v313, %v396
  %v552 = vxor.u32 %v551, 2147483648
  %v553 = vmul.f32 %v552, 1.442695
  %v554 = vpow.pop %v553
  %v555 = vadd.f32 %v554, 1.0
  %v556 = vrcp.pop %v555
  %v557 = vmul.f32 1.0, %v556
  %v558 = vadd.f32 %v316, %v472
  %v559 = vxor.u32 %v558, 2147483648
  %v560 = vmul.f32 %v559, 1.442695
  %v561 = vpow.pop %v560
  %v562 = vadd.f32 %v561, 1.0
  %v563 = vrcp.pop %v562
  %v564 = vmul.f32 1.0, %v563
  %v565 = vmul.f32 %v557, %v548
  %v566 = vadd.f32 %v319, %v565
  %v567 = vtanh.pop %v566
  %v568 = vsub.f32 1.0, %v564
  %v569 = vmul.f32 %v568, %v567
  %v570 = vmul.f32 %v564, 0.0
  %v571 = vadd.f32 %v569, %v570
  %s572 = scalar_lea.vmem [#allocation2], 8
  %v573 = vld [vmem:[%s572] sm:$0xff]
  %s574 = sadd.s32 8, 16
  %s575 = scalar_lea.vmem [#allocation2], %s574
  %v576 = vld [vmem:[%s575] sm:$0xff]
  %s577 = sadd.s32 8, 32
  %s578 = scalar_lea.vmem [#allocation2], %s577
  %v579 = vld [vmem:[%s578] sm:$0xff]
  %v581 = vsel %vm115, %v571, 0
  %583 = vmatprep.subr.mxu0 0.0
  %584 = vmatpush1.msra.mxu0 0.0
  %585 = vmatprep.subr.mxu0 0.0
  %586 = vmatpush1.msra.mxu0 0.0
  %587 = vmatprep.subr.mxu0 0.0
  %588 = vmatpush1.msra.mxu0 0.0
  %589 = vmatprep.subr.mxu0 0.0
  %590 = vmatpush1.msra.mxu0 0.0
  %591 = vmatprep.subr.mxu0 0.0
  %592 = vmatpush1.msra.mxu0 0.0
  %593 = vmatprep.subr.mxu0 0.0
  %594 = vmatpush1.msra.mxu0 0.0
  %595 = vmatprep.subr.mxu0 0.0
  %596 = vmatpush1.msra.mxu0 0.0
  %597 = vmatprep.subr.mxu0 0.0
  %598 = vmatpush1.msra.mxu0 0.0
  %599 = vmatprep.subr.mxu0 0.0
  %600 = vmatpush1.msra.mxu0 0.0
  %601 = vmatprep.subr.mxu0 0.0
  %602 = vmatpush1.msra.mxu0 0.0
  %603 = vmatprep.subr.mxu0 0.0
  %604 = vmatpush1.msra.mxu0 0.0
  %605 = vmatprep.subr.mxu0 0.0
  %606 = vmatpush1.msra.mxu0 0.0
  %607 = vmatprep.subr.mxu0 0.0
  %608 = vmatpush1.msra.mxu0 0.0
  %609 = vmatprep.subr.mxu0 0.0
  %610 = vmatpush1.msra.mxu0 0.0
  %611 = vmatprep.subr.mxu0 0.0
  %612 = vmatpush1.msra.mxu0 %v301
  %613 = vmatprep.subr.mxu0 0.0
  %614 = vmatpush1.msra.mxu0 %v300
  %615 = vmatprep.subr.mxu0 0.0
  %616 = vmatpush2.msra.mxu0 0.0
  %617 = vmatprep.subr.mxu0 0.0
  %618 = vmatpush2.msra.mxu0 0.0
  %619 = vmatprep.subr.mxu0 0.0
  %620 = vmatpush2.msra.mxu0 0.0
  %621 = vmatprep.subr.mxu0 0.0
  %622 = vmatpush2.msra.mxu0 0.0
  %623 = vmatprep.subr.mxu0 0.0
  %624 = vmatpush2.msra.mxu0 0.0
  %625 = vmatprep.subr.mxu0 0.0
  %626 = vmatpush2.msra.mxu0 0.0
  %627 = vmatprep.subr.mxu0 0.0
  %628 = vmatpush2.msra.mxu0 0.0
  %629 = vmatprep.subr.mxu0 0.0
  %630 = vmatpush2.msra.mxu0 0.0
  %631 = vmatprep.subr.mxu0 0.0
  %632 = vmatpush2.msra.mxu0 0.0
  %633 = vmatprep.subr.mxu0 0.0
  %634 = vmatpush2.msra.mxu0 0.0
  %635 = vmatprep.subr.mxu0 0.0
  %636 = vmatpush2.msra.mxu0 0.0
  %637 = vmatprep.subr.mxu0 0.0
  %638 = vmatpush2.msra.mxu0 0.0
  %639 = vmatprep.subr.mxu0 0.0
  %640 = vmatpush2.msra.mxu0 0.0
  %641 = vmatprep.subr.mxu0 0.0
  %642 = vmatpush2.msra.mxu0 0.0
  %643 = vmatprep.subr.mxu0 0.0
  %644 = vmatpush2.msra.mxu0 0.0
  %645 = vmatprep.subr.mxu0 0.0
  %646 = vmatpush2.msra.mxu0 0.0
  %647 = vmatprep.mubr.f32.mxu0 0.0
  %648 = vmatmul.mubr.f32.gmra.mxu0 %v581
  %v649 = vpop.f32.mrf.mxu0
  %v650 = vadd.f32 %v324, %v649
  %v651 = vpop.f32.mrf.mxu0
  %652 = vdwg.mxu0
  %653 = vmatprep.subr.mxu0 0.0
  %654 = vmatpush1.msra.mxu0 0.0
  %655 = vmatprep.subr.mxu0 0.0
  %656 = vmatpush1.msra.mxu0 0.0
  %657 = vmatprep.subr.mxu0 0.0
  %658 = vmatpush1.msra.mxu0 0.0
  %659 = vmatprep.subr.mxu0 0.0
  %660 = vmatpush1.msra.mxu0 0.0
  %661 = vmatprep.subr.mxu0 0.0
  %662 = vmatpush1.msra.mxu0 0.0
  %663 = vmatprep.subr.mxu0 0.0
  %664 = vmatpush1.msra.mxu0 0.0
  %665 = vmatprep.subr.mxu0 0.0
  %666 = vmatpush1.msra.mxu0 0.0
  %667 = vmatprep.subr.mxu0 0.0
  %668 = vmatpush1.msra.mxu0 0.0
  %669 = vmatprep.subr.mxu0 0.0
  %670 = vmatpush1.msra.mxu0 0.0
  %671 = vmatprep.subr.mxu0 0.0
  %672 = vmatpush1.msra.mxu0 0.0
  %673 = vmatprep.subr.mxu0 0.0
  %674 = vmatpush1.msra.mxu0 0.0
  %675 = vmatprep.subr.mxu0 0.0
  %676 = vmatpush1.msra.mxu0 0.0
  %677 = vmatprep.subr.mxu0 0.0
  %678 = vmatpush1.msra.mxu0 0.0
  %679 = vmatprep.subr.mxu0 0.0
  %680 = vmatpush1.msra.mxu0 0.0
  %681 = vmatprep.subr.mxu0 0.0
  %682 = vmatpush1.msra.mxu0 %v304
  %683 = vmatprep.subr.mxu0 0.0
  %684 = vmatpush1.msra.mxu0 %v303
  %685 = vmatprep.subr.mxu0 0.0
  %686 = vmatpush2.msra.mxu0 0.0
  %687 = vmatprep.subr.mxu0 0.0
  %688 = vmatpush2.msra.mxu0 0.0
  %689 = vmatprep.subr.mxu0 0.0
  %690 = vmatpush2.msra.mxu0 0.0
  %691 = vmatprep.subr.mxu0 0.0
  %692 = vmatpush2.msra.mxu0 0.0
  %693 = vmatprep.subr.mxu0 0.0
  %694 = vmatpush2.msra.mxu0 0.0
  %695 = vmatprep.subr.mxu0 0.0
  %696 = vmatpush2.msra.mxu0 0.0
  %697 = vmatprep.subr.mxu0 0.0
  %698 = vmatpush2.msra.mxu0 0.0
  %699 = vmatprep.subr.mxu0 0.0
  %700 = vmatpush2.msra.mxu0 0.0
  %701 = vmatprep.subr.mxu0 0.0
  %702 = vmatpush2.msra.mxu0 0.0
  %703 = vmatprep.subr.mxu0 0.0
  %704 = vmatpush2.msra.mxu0 0.0
  %705 = vmatprep.subr.mxu0 0.0
  %706 = vmatpush2.msra.mxu0 0.0
  %707 = vmatprep.subr.mxu0 0.0
  %708 = vmatpush2.msra.mxu0 0.0
  %709 = vmatprep.subr.mxu0 0.0
  %710 = vmatpush2.msra.mxu0 0.0
  %711 = vmatprep.subr.mxu0 0.0
  %712 = vmatpush2.msra.mxu0 0.0
  %713 = vmatprep.subr.mxu0 0.0
  %714 = vmatpush2.msra.mxu0 0.0
  %715 = vmatprep.subr.mxu0 0.0
  %716 = vmatpush2.msra.mxu0 0.0
  %717 = vmatprep.mubr.f32.mxu0 0.0
  %718 = vmatmul.mubr.f32.gmra.mxu0 %v581
  %v719 = vpop.f32.mrf.mxu0
  %v720 = vadd.f32 %v403, %v719
  %v721 = vpop.f32.mrf.mxu0
  %722 = vdwg.mxu0
  %723 = vmatprep.subr.mxu0 0.0
  %724 = vmatpush1.msra.mxu0 0.0
  %725 = vmatprep.subr.mxu0 0.0
  %726 = vmatpush1.msra.mxu0 0.0
  %727 = vmatprep.subr.mxu0 0.0
  %728 = vmatpush1.msra.mxu0 0.0
  %729 = vmatprep.subr.mxu0 0.0
  %730 = vmatpush1.msra.mxu0 0.0
  %731 = vmatprep.subr.mxu0 0.0
  %732 = vmatpush1.msra.mxu0 0.0
  %733 = vmatprep.subr.mxu0 0.0
  %734 = vmatpush1.msra.mxu0 0.0
  %735 = vmatprep.subr.mxu0 0.0
  %736 = vmatpush1.msra.mxu0 0.0
  %737 = vmatprep.subr.mxu0 0.0
  %738 = vmatpush1.msra.mxu0 0.0
  %739 = vmatprep.subr.mxu0 0.0
  %740 = vmatpush1.msra.mxu0 0.0
  %741 = vmatprep.subr.mxu0 0.0
  %742 = vmatpush1.msra.mxu0 0.0
  %743 = vmatprep.subr.mxu0 0.0
  %744 = vmatpush1.msra.mxu0 0.0
  %745 = vmatprep.subr.mxu0 0.0
  %746 = vmatpush1.msra.mxu0 0.0
  %747 = vmatprep.subr.mxu0 0.0
  %748 = vmatpush1.msra.mxu0 0.0
  %749 = vmatprep.subr.mxu0 0.0
  %750 = vmatpush1.msra.mxu0 0.0
  %751 = vmatprep.subr.mxu0 0.0
  %752 = vmatpush1.msra.mxu0 %v307
  %753 = vmatprep.subr.mxu0 0.0
  %754 = vmatpush1.msra.mxu0 %v306
  %755 = vmatprep.subr.mxu0 0.0
  %756 = vmatpush2.msra.mxu0 0.0
  %757 = vmatprep.subr.mxu0 0.0
  %758 = vmatpush2.msra.mxu0 0.0
  %759 = vmatprep.subr.mxu0 0.0
  %760 = vmatpush2.msra.mxu0 0.0
  %761 = vmatprep.subr.mxu0 0.0
  %762 = vmatpush2.msra.mxu0 0.0
  %763 = vmatprep.subr.mxu0 0.0
  %764 = vmatpush2.msra.mxu0 0.0
  %765 = vmatprep.subr.mxu0 0.0
  %766 = vmatpush2.msra.mxu0 0.0
  %767 = vmatprep.subr.mxu0 0.0
  %768 = vmatpush2.msra.mxu0 0.0
  %769 = vmatprep.subr.mxu0 0.0
  %770 = vmatpush2.msra.mxu0 0.0
  %771 = vmatprep.subr.mxu0 0.0
  %772 = vmatpush2.msra.mxu0 0.0
  %773 = vmatprep.subr.mxu0 0.0
  %774 = vmatpush2.msra.mxu0 0.0
  %775 = vmatprep.subr.mxu0 0.0
  %776 = vmatpush2.msra.mxu0 0.0
  %777 = vmatprep.subr.mxu0 0.0
  %778 = vmatpush2.msra.mxu0 0.0
  %779 = vmatprep.subr.mxu0 0.0
  %780 = vmatpush2.msra.mxu0 0.0
  %781 = vmatprep.subr.mxu0 0.0
  %782 = vmatpush2.msra.mxu0 0.0
  %783 = vmatprep.subr.mxu0 0.0
  %784 = vmatpush2.msra.mxu0 0.0
  %785 = vmatprep.subr.mxu0 0.0
  %786 = vmatpush2.msra.mxu0 0.0
  %787 = vmatprep.mubr.f32.mxu0 0.0
  %788 = vmatmul.mubr.f32.gmra.mxu0 %v581
  %v789 = vpop.f32.mrf.mxu0
  %v790 = vadd.f32 %v479, %v789
  %v791 = vpop.f32.mrf.mxu0
  %792 = vdwg.mxu0
  %v793 = vadd.f32 %v573, %v650
  %v794 = vxor.u32 %v793, 2147483648
  %v795 = vmul.f32 %v794, 1.442695
  %v796 = vpow.pop %v795
  %v797 = vadd.f32 %v796, 1.0
  %v798 = vrcp.pop %v797
  %v799 = vmul.f32 1.0, %v798
  %v800 = vadd.f32 %v576, %v720
  %v801 = vxor.u32 %v800, 2147483648
  %v802 = vmul.f32 %v801, 1.442695
  %v803 = vpow.pop %v802
  %v804 = vadd.f32 %v803, 1.0
  %v805 = vrcp.pop %v804
  %v806 = vmul.f32 1.0, %v805
  %v807 = vmul.f32 %v799, %v790
  %v808 = vadd.f32 %v579, %v807
  %v809 = vtanh.pop %v808
  %v810 = vsub.f32 1.0, %v806
  %v811 = vmul.f32 %v810, %v809
  %v812 = vmul.f32 %v806, %v571
  %v813 = vadd.f32 %v811, %v812
  %814 = vst.msk [vmem:[%s5] sm:$0xff] %vm115, %v813
  // Predicated region
  $region22: #{reference_encoder_forward.7} parent=0 // pred_check
    _
  $region23: #{reference_encoder_forward.7} parent=0 // pred_check_branch
    %816 = sbr.rel (0) target = $region25
  $region24: #{reference_encoder_forward.7} parent=0 // pred_region
    _
  $region25: #{reference_encoder_forward.7} parent=0 // pred_fallthru
    _
  // Predicated region
  $region26: #{reference_encoder_forward.7} parent=0 // pred_check
    _
  $region27: #{reference_encoder_forward.7} parent=0 // pred_check_branch
    %818 = sbr.rel (0) target = $region29
  $region28: #{reference_encoder_forward.7} parent=0 // pred_region
    _
  $region29: #{reference_encoder_forward.7} parent=0 // pred_fallthru
    _

</llo_original>
